<compile_context>
chip_gen: v5e
topology: v5e:2x2
jax: 0.10.0
libtpu: 0.0.40
codegen_flags: <defaults>
</compile_context>

<pallas_src>
import jax
import jax.numpy as jnp
from jax.experimental import pallas as pl
from jax.experimental.pallas import tpu as pltpu


def _round_up(x, m):
    return (x + m - 1) // m * m


def _fused_cdist_colsum_norm_kernel(n_rows_ref, emb_ref, ct_ref, c2_ref,
                                    out_ref, acc_ref):
    """Grid = (batch b, row-tile i).

    For batch b, accumulates column sums of pairwise L2 distances between the
    (TN, D) embedding tile and the K cluster centers into acc_ref (1, K);
    on the last row-tile step min-max normalizes and writes out_ref[b].
    """
    b = pl.program_id(0)
    i = pl.program_id(1)
    n_steps = pl.num_programs(1)

    tn = emb_ref.shape[1]
    k = ct_ref.shape[1]

    n_rows = n_rows_ref[b]          # true (unpadded) row count for this batch
    row_start = i * tn

    @pl.when(i == 0)
    def _():
        acc_ref[...] = jnp.zeros_like(acc_ref)

    # Skip tiles entirely beyond this batch's valid rows.
    @pl.when(row_start < n_rows)
    def _():
        u = emb_ref[0].astype(jnp.float32)                      # (TN, D)
        u2 = jnp.sum(u * u, axis=1, keepdims=True)              # (TN, 1)
        # Cross term on the MXU: (TN, D) x (D, K) -> (TN, K), K on lanes.
        cross = jnp.dot(u, ct_ref[...],
                        preferred_element_type=jnp.float32)     # (TN, K)
        d2 = u2 + c2_ref[...] - 2.0 * cross
        dist = jnp.sqrt(jnp.maximum(d2, 0.0))                   # (TN, K)

        full_tile = row_start + tn <= n_rows

        @pl.when(full_tile)
        def _():
            # Steady state: no masking work at all.
            acc_ref[...] += jnp.sum(dist, axis=0, keepdims=True)

        @pl.when(jnp.logical_not(full_tile))
        def _():
            # Tile straddles the valid-row boundary (covers both the
            # stack-to-common-N zero pad rows and the implicit trailing-block
            # padding, whose contents are unspecified).
            row = row_start + jax.lax.broadcasted_iota(jnp.int32, (tn, k), 0)
            acc_ref[...] += jnp.sum(jnp.where(row < n_rows, dist, 0.0),
                                    axis=0, keepdims=True)

    @pl.when(i == n_steps - 1)
    def _():
        csum = acc_ref[...]                                      # (1, K)
        cmin = jnp.min(csum)
        cmax = jnp.max(csum)
        denom = cmax - cmin
        # Guard the degenerate all-equal case (torch reference would NaN here).
        safe = jnp.where(denom > 0.0, denom, 1.0)
        out_ref[0] = (csum - cmin) / safe                        # (1, K)


def extended_cluster_forward(user_embeddings1, user_embeddings2, cluster_centers,
                             *, tile_rows=2048):
    """Fused forward for both embedding sets. Returns (norm_dist1, norm_dist2)."""
    n1, d = user_embeddings1.shape
    n2, d2 = user_embeddings2.shape
    assert d == d2, "embedding dims must match"
    k = cluster_centers.shape[0]

    # Stack to a common (2, n_arr, D); only an 8-row alignment pad beyond the
    # max row count (no padding to a tile multiple — the grid uses pl.cdiv and
    # the kernel masks the tail).
    n_arr = _round_up(max(n1, n2), 8)

    def pad_rows(e):
        pad = n_arr - e.shape[0]
        return jnp.pad(e, ((0, pad), (0, 0))) if pad else e

    emb = jnp.stack([pad_rows(user_embeddings1), pad_rows(user_embeddings2)],
                    axis=0)                                       # (2, n_arr, D)

    tn = min(_round_up(tile_rows, 8), n_arr)                      # sublane-aligned
    n_steps = pl.cdiv(n_arr, tn)

    # Grid-invariant center terms, computed once in the wrapper.
    centers = cluster_centers.astype(jnp.float32)
    ct = centers.T                                                # (D, K)
    c2 = jnp.sum(centers * centers, axis=1)[None, :]              # (1, K)

    n_rows = jnp.array([n1, n2], dtype=jnp.int32)                 # scalar prefetch

    out = pl.pallas_call(
        _fused_cdist_colsum_norm_kernel,
        out_shape=jax.ShapeDtypeStruct((2, 1, k), jnp.float32),
        grid_spec=pltpu.PrefetchScalarGridSpec(
            num_scalar_prefetch=1,
            grid=(2, n_steps),
            in_specs=[
                pl.BlockSpec((1, tn, d), lambda b, i, nr: (b, i, 0)),  # emb tile
                pl.BlockSpec((d, k), lambda b, i, nr: (0, 0)),         # centers^T
                pl.BlockSpec((1, k), lambda b, i, nr: (0, 0)),         # ||c||^2
            ],
            out_specs=pl.BlockSpec((1, 1, k), lambda b, i, nr: (b, 0, 0)),
            scratch_shapes=[pltpu.VMEM((1, k), jnp.float32)],
        ),
        compiler_params=pltpu.CompilerParams(
            # batch axis -> v7x megacore; row axis is the reduction.
            dimension_semantics=("parallel", "arbitrary")),
    )(n_rows, emb, ct, c2)

    out = out.reshape(2, k)
    return out[0], out[1]


def _reference_forward(e1, e2, c):
    def one(e):
        dist = jnp.sqrt(jnp.sum((e[:, None, :] - c[None, :, :]) ** 2, axis=-1))
        s = jnp.sum(dist, axis=0)
        return (s - s.min()) / (s.max() - s.min())
    return one(e1), one(e2)


if __name__ == "__main__":
    key = jax.random.PRNGKey(0)
    k1, k2, k3 = jax.random.split(key, 3)

    K, embedding_dim = 16, 32
    n_users1, n_users2 = 300, 200      # deliberately not tile-aligned, different N

    user_embeddings1 = jax.random.normal(k1, (n_users1, embedding_dim),
                                         dtype=jnp.float32)
    user_embeddings2 = jax.random.normal(k2, (n_users2, embedding_dim),
                                         dtype=jnp.float32)
    cluster_centers = jax.random.normal(k3, (K, embedding_dim),
                                        dtype=jnp.float32)

    ref1, ref2 = _reference_forward(user_embeddings1, user_embeddings2,
                                    cluster_centers)

    # Default large tile: single grid step per batch.
    norm1, norm2 = extended_cluster_forward(
        user_embeddings1, user_embeddings2, cluster_centers)
    norm1 = jax.block_until_ready(norm1)
    norm2 = jax.block_until_ready(norm2)
    assert norm1.shape == (K,) and norm2.shape == (K,)
    assert jnp.allclose(norm1, ref1, atol=1e-3, rtol=1e-3), (norm1, ref1)
    assert jnp.allclose(norm2, ref2, atol=1e-3, rtol=1e-3), (norm2, ref2)

    # Small tile: exercises multi-step grid, masked-tail path, skipped tiles
    # for the shorter batch, and the implicit trailing-block padding.
    s1, s2 = extended_cluster_forward(
        user_embeddings1, user_embeddings2, cluster_centers, tile_rows=128)
    s1 = jax.block_until_ready(s1)
    s2 = jax.block_until_ready(s2)
    assert jnp.allclose(s1, ref1, atol=1e-3, rtol=1e-3), (s1, ref1)
    assert jnp.allclose(s2, ref2, atol=1e-3, rtol=1e-3), (s2, ref2)

    print("KERNEL_OK")
</pallas_src>

<mosaic_0001>
module attributes {stable_mosaic.version = 11 : i64} {
  func.func @_fused_cdist_colsum_norm_kernel(%arg0: i32, %arg1: i32, %arg2: memref<2xi32, #tpu.memory_space<smem>>, %arg3: memref<1x304x32xf32, #tpu.memory_space<vmem>>, %arg4: memref<32x16xf32, #tpu.memory_space<vmem>>, %arg5: memref<1x16xf32, #tpu.memory_space<vmem>>, %arg6: memref<1x1x16xf32, #tpu.memory_space<vmem>>, %arg7: memref<1x16xf32, #tpu.memory_space<vmem>>) attributes {dimension_semantics = [#tpu.dimension_semantics<parallel>, #tpu.dimension_semantics<arbitrary>], iteration_bounds = array<i64: 2, 1>, scalar_prefetch = 1 : i64, scratch_operands = 1 : i64, tpu.core_type = #tpu.core_type<tc>, window_params = [{transform_indices = @transform_0, window_bounds = array<i64: 1, 304, 32>}, {pipeline_mode = #tpu.pipeline_mode<synchronous>, transform_indices = @transform_1, window_bounds = array<i64: 32, 16>}, {pipeline_mode = #tpu.pipeline_mode<synchronous>, transform_indices = @transform_2, window_bounds = array<i64: 1, 16>}, {transform_indices = @transform_3, window_bounds = array<i64: 1, 1, 16>}]} {
    %0 = arith.index_cast %arg0 : i32 to index
    %1 = memref.load %arg2[%0] : memref<2xi32, #tpu.memory_space<smem>>
    %c304_i32 = arith.constant 304 : i32
    %2 = arith.muli %arg1, %c304_i32 : i32
    %c0_i32 = arith.constant 0 : i32
    %3 = arith.cmpi eq, %arg1, %c0_i32 : i32
    %4 = arith.extui %3 : i1 to i32
    %c0_i32_0 = arith.constant 0 : i32
    %5 = arith.cmpi ne, %4, %c0_i32_0 : i32
    scf.if %5 {
      %cst = arith.constant 0.000000e+00 : f32
      %12 = vector.broadcast %cst : f32 to vector<1x16xf32>
      %c0 = arith.constant 0 : index
      %c0_4 = arith.constant 0 : index
      %13 = vector.load %arg7[%c0, %c0_4] : memref<1x16xf32, #tpu.memory_space<vmem>>, vector<1x16xf32>
      tpu.vector_store %arg7[%c0, %c0_4], %12 {strides = array<i32>} : memref<1x16xf32, #tpu.memory_space<vmem>>, vector<1x16xf32>,
    } else {
    }
    %6 = arith.cmpi slt, %2, %1 : i32
    %7 = arith.extui %6 : i1 to i32
    %c0_i32_1 = arith.constant 0 : i32
    %8 = arith.cmpi ne, %7, %c0_i32_1 : i32
    scf.if %8 {
      %c0 = arith.constant 0 : index
      %c0_4 = arith.constant 0 : index
      %c0_5 = arith.constant 0 : index
      %12 = vector.load %arg3[%c0, %c0_4, %c0_5] : memref<1x304x32xf32, #tpu.memory_space<vmem>>, vector<1x304x32xf32>
      %13 = vector.shape_cast %12 : vector<1x304x32xf32> to vector<304x32xf32>
      %14 = arith.mulf %13, %13 : vector<304x32xf32>
      %cst = arith.constant dense<0.000000e+00> : vector<304xf32>
      %15 = vector.multi_reduction <add>, %14, %cst [1] : vector<304x32xf32> to vector<304xf32>
      %16 = vector.shape_cast %15 : vector<304xf32> to vector<304x1xf32>
      %c0_6 = arith.constant 0 : index
      %c0_7 = arith.constant 0 : index
      %17 = vector.load %arg4[%c0_6, %c0_7] : memref<32x16xf32, #tpu.memory_space<vmem>>, vector<32x16xf32>
      %cst_8 = arith.constant dense<0.000000e+00> : vector<304x16xf32>
      %18 = tpu.matmul %13, %17, %cst_8 {dimension_numbers = #tpu.dot_dimension_numbers<[1], [0], [0], [1], [0, 0, 1, 1], [], []>} : vector<304x32xf32>, vector<32x16xf32>, vector<304x16xf32> -> vector<304x16xf32>
      %c0_9 = arith.constant 0 : index
      %c0_10 = arith.constant 0 : index
      %19 = vector.load %arg5[%c0_9, %c0_10] : memref<1x16xf32, #tpu.memory_space<vmem>>, vector<1x16xf32>
      %20 = vector.broadcast %16 : vector<304x1xf32> to vector<304x16xf32>
      %21 = vector.broadcast %19 : vector<1x16xf32> to vector<304x16xf32>
      %22 = arith.addf %20, %21 : vector<304x16xf32>
      %cst_11 = arith.constant 2.000000e+00 : f32
      %23 = vector.broadcast %cst_11 : f32 to vector<304x16xf32>
      %24 = arith.mulf %23, %18 : vector<304x16xf32>
      %25 = arith.subf %22, %24 : vector<304x16xf32>
      %cst_12 = arith.constant 0.000000e+00 : f32
      %26 = vector.broadcast %cst_12 : f32 to vector<304x16xf32>
      %27 = arith.maximumf %25, %26 : vector<304x16xf32>
      %28 = math.sqrt %27 : vector<304x16xf32>
      %c304_i32_13 = arith.constant 304 : i32
      %29 = arith.addi %2, %c304_i32_13 : i32
      %30 = arith.cmpi sle, %29, %1 : i32
      %31 = arith.extui %30 : i1 to i32
      %c0_i32_14 = arith.constant 0 : i32
      %32 = arith.cmpi ne, %31, %c0_i32_14 : i32
      scf.if %32 {
        %c0_16 = arith.constant 0 : index
        %c0_17 = arith.constant 0 : index
        %36 = vector.load %arg7[%c0_16, %c0_17] : memref<1x16xf32, #tpu.memory_space<vmem>>, vector<1x16xf32>
        %cst_18 = arith.constant dense<0.000000e+00> : vector<16xf32>
        %37 = vector.multi_reduction <add>, %28, %cst_18 [0] : vector<304x16xf32> to vector<16xf32>
        %38 = vector.shape_cast %37 : vector<16xf32> to vector<1x16xf32>
        %39 = arith.addf %36, %38 : vector<1x16xf32>
        %c0_19 = arith.constant 0 : index
        %c0_20 = arith.constant 0 : index
        %40 = vector.load %arg7[%c0_19, %c0_20] : memref<1x16xf32, #tpu.memory_space<vmem>>, vector<1x16xf32>
        tpu.vector_store %arg7[%c0_19, %c0_20], %39 {strides = array<i32>} : memref<1x16xf32, #tpu.memory_space<vmem>>, vector<1x16xf32>,
      } else {
      }
      %true = arith.constant true
      %33 = arith.xori %30, %true : i1
      %34 = arith.extui %33 : i1 to i32
      %c0_i32_15 = arith.constant 0 : i32
      %35 = arith.cmpi ne, %34, %c0_i32_15 : i32
      scf.if %35 {
        %36 = tpu.iota {dimensions = array<i32: 0>} : vector<304x16xi32>
        %37 = vector.broadcast %2 : i32 to vector<304x16xi32>
        %38 = arith.addi %37, %36 : vector<304x16xi32>
        %c0_16 = arith.constant 0 : index
        %c0_17 = arith.constant 0 : index
        %39 = vector.load %arg7[%c0_16, %c0_17] : memref<1x16xf32, #tpu.memory_space<vmem>>, vector<1x16xf32>
        %40 = vector.broadcast %1 : i32 to vector<304x16xi32>
        %41 = arith.cmpi slt, %38, %40 : vector<304x16xi32>
        %cst_18 = arith.constant 0.000000e+00 : f32
        %42 = vector.broadcast %cst_18 : f32 to vector<304x16xf32>
        %43 = arith.select %41, %28, %42 : vector<304x16xi1>, vector<304x16xf32>
        %cst_19 = arith.constant dense<0.000000e+00> : vector<16xf32>
        %44 = vector.multi_reduction <add>, %43, %cst_19 [0] : vector<304x16xf32> to vector<16xf32>
        %45 = vector.shape_cast %44 : vector<16xf32> to vector<1x16xf32>
        %46 = arith.addf %39, %45 : vector<1x16xf32>
        %c0_20 = arith.constant 0 : index
        %c0_21 = arith.constant 0 : index
        %47 = vector.load %arg7[%c0_20, %c0_21] : memref<1x16xf32, #tpu.memory_space<vmem>>, vector<1x16xf32>
        tpu.vector_store %arg7[%c0_20, %c0_21], %46 {strides = array<i32>} : memref<1x16xf32, #tpu.memory_space<vmem>>, vector<1x16xf32>,
      } else {
      }
    } else {
    }
    %c0_i32_2 = arith.constant 0 : i32
    %9 = arith.cmpi eq, %arg1, %c0_i32_2 : i32
    %10 = arith.extui %9 : i1 to i32
    %c0_i32_3 = arith.constant 0 : i32
    %11 = arith.cmpi ne, %10, %c0_i32_3 : i32
    scf.if %11 {
      %c0 = arith.constant 0 : index
      %c0_4 = arith.constant 0 : index
      %12 = vector.load %arg7[%c0, %c0_4] : memref<1x16xf32, #tpu.memory_space<vmem>>, vector<1x16xf32>
      %13 = vector.shape_cast %12 : vector<1x16xf32> to vector<1x1x16xf32>
      %cst = arith.constant dense<0x7F800000> : vector<1xf32>
      %14 = vector.multi_reduction <minimumf>, %13, %cst [1, 2] : vector<1x1x16xf32> to vector<1xf32>
      %15 = vector.shape_cast %14 : vector<1xf32> to vector<1x1x1xf32>
      %16 = vector.extract %15[0, 0, 0] : f32 from vector<1x1x1xf32>
      %17 = vector.shape_cast %12 : vector<1x16xf32> to vector<1x1x16xf32>
      %cst_5 = arith.constant dense<0xFF800000> : vector<1xf32>
      %18 = vector.multi_reduction <maximumf>, %17, %cst_5 [1, 2] : vector<1x1x16xf32> to vector<1xf32>
      %19 = vector.shape_cast %18 : vector<1xf32> to vector<1x1x1xf32>
      %20 = vector.extract %19[0, 0, 0] : f32 from vector<1x1x1xf32>
      %21 = arith.subf %20, %16 : f32
      %cst_6 = arith.constant 0.000000e+00 : f32
      %22 = arith.cmpf ogt, %21, %cst_6 : f32
      %cst_7 = arith.constant 1.000000e+00 : f32
      %23 = arith.select %22, %21, %cst_7 : f32
      %24 = vector.broadcast %16 : f32 to vector<1x16xf32>
      %25 = arith.subf %12, %24 : vector<1x16xf32>
      %26 = vector.broadcast %23 : f32 to vector<1x16xf32>
      %27 = arith.divf %25, %26 : vector<1x16xf32>
      %c0_8 = arith.constant 0 : index
      %c0_9 = arith.constant 0 : index
      %c0_10 = arith.constant 0 : index
      %28 = vector.load %arg6[%c0_8, %c0_9, %c0_10] : memref<1x1x16xf32, #tpu.memory_space<vmem>>, vector<1x1x16xf32>
      %29 = vector.shape_cast %28 : vector<1x1x16xf32> to vector<1x16xf32>
      %30 = vector.shape_cast %27 : vector<1x16xf32> to vector<1x1x16xf32>
      tpu.vector_store %arg6[%c0_8, %c0_9, %c0_10], %30 {strides = array<i32>} : memref<1x1x16xf32, #tpu.memory_space<vmem>>, vector<1x1x16xf32>,
    } else {
    }
    return
  }
  func.func @transform_0(%arg0: i32, %arg1: i32, %arg2: memref<2xi32, #tpu.memory_space<smem>>) -> (i32, i32, i32) {
    %c0_i32 = arith.constant 0 : i32
    %c0_i32_0 = arith.constant 0 : i32
    return %arg0, %arg1, %c0_i32 : i32, i32, i32
  }
  func.func @transform_1(%arg0: i32, %arg1: i32, %arg2: memref<2xi32, #tpu.memory_space<smem>>) -> (i32, i32) {
    %c0_i32 = arith.constant 0 : i32
    %c0_i32_0 = arith.constant 0 : i32
    %c0_i32_1 = arith.constant 0 : i32
    return %c0_i32, %c0_i32_0 : i32, i32
  }
  func.func @transform_2(%arg0: i32, %arg1: i32, %arg2: memref<2xi32, #tpu.memory_space<smem>>) -> (i32, i32) {
    %c0_i32 = arith.constant 0 : i32
    %c0_i32_0 = arith.constant 0 : i32
    %c0_i32_1 = arith.constant 0 : i32
    return %c0_i32, %c0_i32_0 : i32, i32
  }
  func.func @transform_3(%arg0: i32, %arg1: i32, %arg2: memref<2xi32, #tpu.memory_space<smem>>) -> (i32, i32, i32) {
    %c0_i32 = arith.constant 0 : i32
    %c0_i32_0 = arith.constant 0 : i32
    %c0_i32_1 = arith.constant 0 : i32
    return %arg0, %c0_i32, %c0_i32_0 : i32, i32, i32
  }
}

</mosaic_0001>

<llo_original>
// kernel: tpu_custom_call.1
$region0: #{tpu_custom_call.1}
  #allocation0 [shape = 'u32[]', space=smem, size = 0x4, offset = 0x4, fixed_abs, tag = 'smem constant byte address 0x4 - core index']
  #allocation1 [shape = 'u32[72,128]{1,0:T(1,128)}', space=vmem, size = 0x9000, scoped, tag = 'internal scratch']
  #allocation2 [shape = 'f32[1,16]{1,0:T(1,128)}', space=vmem, size = 0x200, scoped, tag = 'scratch operand']
  #allocation3 [shape = 's32[1]{0}', space=sflag, size = 0x4, scoped, tag = 'scoped memory for tpu_custom_call.1']
  #allocation4 [shape = 'u8[512]{0}', space=smem, size = 0x200, scoped, tag = 'prefetched SMEM operand 0']
  %s0 = inlined_call_operand.vmem [shape: s32[2], index: 0, kind: input, shape index: {}]
  %s1 = inlined_call_operand.vmem [shape: f32[2,304,32], index: 1, kind: input, shape index: {}]
  %s2 = inlined_call_operand.vmem [shape: f32[32,16], index: 2, kind: input, shape index: {}]
  %s3 = inlined_call_operand.vmem [shape: f32[1,16], index: 3, kind: input, shape index: {}]
  %s4 = inlined_call_operand.hbm [shape: f32[2,1,16], index: 4, kind: output, shape index: {}]
  %s5 = sld [smem:[#allocation0]]
  $region65: #{tpu_custom_call.1} parent=0
    _
  %s7 = ssub.s32 1, %s5
  %s8 = scalar_select 0, %s7, %s5
  %s10 = sshll.u32 %s0, 4
  %s11 = int_to_ptr.vmem [resolvable:$true] %s10
  %13 = dma.vmem_to_smem %s11, 16, [#allocation4], [#allocation3]
  %15 = dma.done [#allocation3], 16
  %16 = sfence
  $region1: #{tpu_custom_call.1} parent=0
    #allocation5 [shape = 'u8[1024]{0}', space=vmem, size = 0x400, scoped, tag = 'output window, operand 0']
    #allocation6 [shape = 's32[2]{0}', space=sflag, size = 0x8, scoped, tag = 'scoped memory for tpu_custom_call.1']
    %17 = vsyncpa [#allocation6], 0
    %s18 = scalar_lea.sflag [#allocation6], 1
    %19 = vsyncpa %s18, 0
    loop: start=0, step=1, limit=4
    $region2: #{tpu_custom_call.1} parent=1 // loop_pre_header
      _
    $region3: #{tpu_custom_call.1} parent=1 // loop_header
      %s21 = sphi 0, %s25
      %p22 = scmp.ge.s32.totalorder %s21, 4
      %s28 = sphi 0, %s40
      %s29 = sphi 0, %s36
      %s30 = sphi 0, %s28
      %s31 = sphi 0, %s29
      %s32 = sphi 0, %s30
      %s33 = sphi 0, %s31
      %s45 = sphi 0, %s47
      %s48 = sphi 0, %s45
      %s49 = sphi 0, %s48
      %s65 = sphi 0, %s49
      %s69 = sphi 0, %s69
      %s71 = sphi 0, %s69
      %s72 = sphi 0, %s71
      %s86 = sphi 0, %s72
      %s90 = sphi 0, %s90
      %s92 = sphi 0, %s90
      %s93 = sphi 0, %s92
      %s107 = sphi 0, %s93
      %s113 = sphi 0, %s115
      %s116 = sphi 0, %s113
      %s117 = sphi 0, %s116
      %s133 = sphi 0, %s117
    $region4: #{tpu_custom_call.1} parent=1 // loop_header_branch
      %24 = sbr.rel (%p22) target = $region8
    $region5: #{tpu_custom_call.1} parent=1 // loop_body
      %s26 = ssub.s32 %s21, 1
      %s27 = ssub.s32 %s21, 2
      %s34 = sadd.s32 1, %s29
      %p35 = scmp.ge.s32.totalorder %s34, 1
      %s36 = scalar_select %p35, 0, %s34
      %s37 = sadd.s32 1, %s28
      %s38 = scalar_select %p35, %s37, %s28
      %p39 = scmp.ge.s32.totalorder %s38, 2
      %s40 = scalar_select %p39, 0, %s38
      %s41 = ssub.s32 %s28, %s40
      %s42 = ssub.s32 %s29, %s36
      %s43 = sor.u32 %s41, %s42
      %p44 = scmp.eq.s32.totalorder %s43, 0
      %s46 = sadd.s32 %s45, 1
      %s47 = scalar_select %p44, %s45, %s46
      %p50 = pneg %p44
      %p51 = scmp.eq.s32.totalorder %s21, 1
      %p52 = por %p50, %p51
      %p53 = scmp.ne.s32.totalorder %s45, %s48
      %p54 = scmp.eq.s32.totalorder %s21, 0
      %p55 = por %p53, %p54
      %p56 = scmp.ne.s32.totalorder %s45, %s48
      %p57 = scmp.eq.s32.totalorder %s26, 1
      %p58 = por %p56, %p57
      %p59 = scmp.ne.s32.totalorder %s48, %s49
      %p60 = scmp.eq.s32.totalorder %s26, 0
      %p61 = por %p59, %p60
      %p62 = scmp.ne.s32.totalorder %s48, %s49
      %p63 = scmp.eq.s32.totalorder %s27, 1
      %p64 = por %p62, %p63
      %p66 = scmp.ne.s32.totalorder %s49, %s65
      %p67 = scmp.eq.s32.totalorder %s27, 0
      %p68 = por %p66, %p67
      %s70 = sadd.s32 %s69, 1
      %p73 = scmp.eq.s32.totalorder %s21, 1
      %p74 = scmp.ne.s32.totalorder %s69, %s71
      %p75 = scmp.eq.s32.totalorder %s21, 0
      %p76 = por %p74, %p75
      %p77 = scmp.ne.s32.totalorder %s69, %s71
      %p78 = scmp.eq.s32.totalorder %s26, 1
      %p79 = por %p77, %p78
      %p80 = scmp.ne.s32.totalorder %s71, %s72
      %p81 = scmp.eq.s32.totalorder %s26, 0
      %p82 = por %p80, %p81
      %p83 = scmp.ne.s32.totalorder %s71, %s72
      %p84 = scmp.eq.s32.totalorder %s27, 1
      %p85 = por %p83, %p84
      %p87 = scmp.ne.s32.totalorder %s72, %s86
      %p88 = scmp.eq.s32.totalorder %s27, 0
      %p89 = por %p87, %p88
      %s91 = sadd.s32 %s90, 1
      %p94 = scmp.eq.s32.totalorder %s21, 1
      %p95 = scmp.ne.s32.totalorder %s90, %s92
      %p96 = scmp.eq.s32.totalorder %s21, 0
      %p97 = por %p95, %p96
      %p98 = scmp.ne.s32.totalorder %s90, %s92
      %p99 = scmp.eq.s32.totalorder %s26, 1
      %p100 = por %p98, %p99
      %p101 = scmp.ne.s32.totalorder %s92, %s93
      %p102 = scmp.eq.s32.totalorder %s26, 0
      %p103 = por %p101, %p102
      %p104 = scmp.ne.s32.totalorder %s92, %s93
      %p105 = scmp.eq.s32.totalorder %s27, 1
      %p106 = por %p104, %p105
      %p108 = scmp.ne.s32.totalorder %s93, %s107
      %p109 = scmp.eq.s32.totalorder %s27, 0
      %p110 = por %p108, %p109
      %s111 = ssub.s32 %s28, %s40
      %p112 = scmp.eq.s32.totalorder %s111, 0
      %s114 = sadd.s32 %s113, 1
      %s115 = scalar_select %p112, %s113, %s114
      %p118 = pneg %p112
      %p119 = scmp.eq.s32.totalorder %s21, 1
      %p120 = por %p118, %p119
      %p121 = scmp.ne.s32.totalorder %s113, %s116
      %p122 = scmp.eq.s32.totalorder %s21, 0
      %p123 = por %p121, %p122
      %p124 = scmp.ne.s32.totalorder %s113, %s116
      %p125 = scmp.eq.s32.totalorder %s26, 1
      %p126 = por %p124, %p125
      %p127 = scmp.ne.s32.totalorder %s116, %s117
      %p128 = scmp.eq.s32.totalorder %s26, 0
      %p129 = por %p127, %p128
      %p130 = scmp.ne.s32.totalorder %s116, %s117
      %p131 = scmp.eq.s32.totalorder %s27, 1
      %p132 = por %p130, %p131
      %p134 = scmp.ne.s32.totalorder %s117, %s133
      %p135 = scmp.eq.s32.totalorder %s27, 0
      %p136 = por %p134, %p135
      %p137 = scmp.le.s32.totalorder 1, %s21
      %p138 = scmp.lt.s32.totalorder %s21, 3
      %p139 = pnand %p137, %p138
      %p140 = pneg %p139
      // Predicated region
      $region9: #{tpu_custom_call.1} parent=5 // pred_check
        _
      $region10: #{tpu_custom_call.1} parent=5 // pred_check_branch
        %142 = sbr.rel (%p139) target = $region12
      $region11: #{tpu_custom_call.1} parent=5 // pred_region
        %s143 = ssub.s32 %s21, 1
        // Predicated region
        $region13: #{tpu_custom_call.1} parent=11 // pred_check
          %p144 = pneg %p82
        $region14: #{tpu_custom_call.1} parent=11 // pred_check_branch
          %146 = sbr.rel (%p144) target = $region16
        $region15: #{tpu_custom_call.1} parent=11 // pred_region
          _
        $region16: #{tpu_custom_call.1} parent=11 // pred_fallthru
          _
        // Predicated region
        $region17: #{tpu_custom_call.1} parent=11 // pred_check
          %p147 = pneg %p103
        $region18: #{tpu_custom_call.1} parent=11 // pred_check_branch
          %149 = sbr.rel (%p147) target = $region20
        $region19: #{tpu_custom_call.1} parent=11 // pred_region
          _
        $region20: #{tpu_custom_call.1} parent=11 // pred_fallthru
          _
      $region12: #{tpu_custom_call.1} parent=5 // pred_fallthru
        _
      %p150 = scmp.lt.s32.totalorder %s21, 2
      // Predicated region
      $region21: #{tpu_custom_call.1} parent=5 // pred_check
        %p151 = pneg %p150
      $region22: #{tpu_custom_call.1} parent=5 // pred_check_branch
        %153 = sbr.rel (%p151) target = $region24
      $region23: #{tpu_custom_call.1} parent=5 // pred_region
        // Predicated region
        $region25: #{tpu_custom_call.1} parent=23 // pred_check
          %p154 = pneg %p55
        $region26: #{tpu_custom_call.1} parent=23 // pred_check_branch
          %156 = sbr.rel (%p154) target = $region28
        $region27: #{tpu_custom_call.1} parent=23 // pred_region
          %s157 = smul.u32 38, %s29
          %p158 = scmp.lt.s32.totalorder %s28, 1
          %s159 = scalar_select %p158, %s28, 1
          %p160 = scmp.lt.s32.totalorder %s157, 37
          %s161 = scalar_select %p160, %s157, 37
          %s162 = smul.addr %s159, 38
          %s163 = sadd.s32 %s161, %s162
          %s164 = smul.addr %s163, 8
          %s165 = scalar_lea.vmem %s1, %s164
          %s166 = smul.u32 38, %s29
        $region28: #{tpu_custom_call.1} parent=23 // pred_fallthru
          _
      $region24: #{tpu_custom_call.1} parent=5 // pred_fallthru
        _
      %p167 = scmp.le.s32.totalorder 1, %s21
      %p168 = scmp.lt.s32.totalorder %s21, 3
      %p169 = pnand %p167, %p168
      %p170 = pneg %p169
      // Predicated region
      $region29: #{tpu_custom_call.1} parent=5 // pred_check
        _
      $region30: #{tpu_custom_call.1} parent=5 // pred_check_branch
        %172 = sbr.rel (%p169) target = $region32
      $region31: #{tpu_custom_call.1} parent=5 // pred_region
        %s173 = ssub.s32 %s21, 1
        %s174 = smul.u32 38, %s31
        %p175 = scmp.lt.s32.totalorder %s30, 1
        %s176 = scalar_select %p175, %s30, 1
        %p177 = scmp.lt.s32.totalorder %s174, 37
        %s178 = scalar_select %p177, %s174, 37
        %s179 = smul.addr %s176, 38
        %s180 = sadd.s32 %s178, %s179
        %s181 = smul.addr %s180, 8
        %s182 = scalar_lea.vmem %s1, %s181
        %p183 = pneg %p61
        %p184 = pneg %p58
        %p185 = pneg %p82
        %p186 = pneg %p79
        %p187 = pneg %p103
        %p188 = pneg %p100
        %p189 = pneg %p129
        %p190 = pneg %p126
        %s191 = sand.u32 %s116, 1
        %s192 = scalar_lea.sflag [#allocation6], %s191
        %s193 = sand.u32 %s116, 1
        %s194 = scalar_lea.vmem [#allocation5], %s193
        %s195 = smul.u32 38, %s31
        %p196 = scmp.lt.s32.totalorder %s30, 1
        %s197 = scalar_select %p196, %s30, 1
        %p198 = scmp.lt.s32.totalorder %s195, 37
        %s199 = scalar_select %p198, %s195, 37
        %s200 = smul.addr %s197, 38
        %s201 = sadd.s32 %s199, %s200
        %s202 = smul.addr %s201, 8
        %s203 = scalar_lea.vmem %s1, %s202
        %s204 = smul.u32 38, %s31
        %s205 = sld [smem:[#allocation4 + %s30]]
        %s206 = smul.u32 %s31, 304
        %p207 = scmp.eq.s32.totalorder %s31, 0
        // Predicated region
        $region33: #{tpu_custom_call.1} parent=31 // pred_check
          %p208 = pneg %p207
        $region34: #{tpu_custom_call.1} parent=31 // pred_check_branch
          %210 = sbr.rel (%p208) target = $region36
        $region35: #{tpu_custom_call.1} parent=31 // pred_region
          %vm211 = vcmask 122880
          %212 = vst.msk [vmem:[#allocation2] sm:$0x1] %vm211, 0.0
        $region36: #{tpu_custom_call.1} parent=31 // pred_fallthru
          _
        %p213 = scmp.lt.s32.totalorder %s206, %s205
        // Predicated region
        $region37: #{tpu_custom_call.1} parent=31 // pred_check
          %p214 = pneg %p213
        $region38: #{tpu_custom_call.1} parent=31 // pred_check_branch
          %216 = sbr.rel (%p214) target = $region40
        $region39: #{tpu_custom_call.1} parent=31 // pred_region
          %v217 = vld [vmem:[%s203] sm:$0xff]
          %v218 = vld [vmem:[%s203 + $0x8] sm:$0xff]
          %v219 = vld [vmem:[%s203 + $0x10] sm:$0xff]
          %v220 = vld [vmem:[%s203 + $0x18] sm:$0xff]
          %v221 = vld [vmem:[%s203 + $0x20] sm:$0xff]
          %v222 = vld [vmem:[%s203 + $0x28] sm:$0xff]
          %v223 = vld [vmem:[%s203 + $0x30] sm:$0xff]
          %v224 = vld [vmem:[%s203 + $0x38] sm:$0xff]
          %v225 = vld [vmem:[%s203 + $0x40] sm:$0xff]
          %v226 = vld [vmem:[%s203 + $0x48] sm:$0xff]
          %v227 = vld [vmem:[%s203 + $0x50] sm:$0xff]
          %v228 = vld [vmem:[%s203 + $0x58] sm:$0xff]
          %v229 = vld [vmem:[%s203 + $0x60] sm:$0xff]
          %v230 = vld [vmem:[%s203 + $0x68] sm:$0xff]
          %v231 = vld [vmem:[%s203 + $0x70] sm:$0xff]
          %v232 = vld [vmem:[%s203 + $0x78] sm:$0xff]
          %v233 = vld [vmem:[%s203 + $0x80] sm:$0xff]
          %v234 = vld [vmem:[%s203 + $0x88] sm:$0xff]
          %v235 = vld [vmem:[%s203 + $0x90] sm:$0xff]
          %v236 = vld [vmem:[%s203 + $0x98] sm:$0xff]
          %v237 = vld [vmem:[%s203 + $0xa0] sm:$0xff]
          %v238 = vld [vmem:[%s203 + $0xa8] sm:$0xff]
          %v239 = vld [vmem:[%s203 + $0xb0] sm:$0xff]
          %v240 = vld [vmem:[%s203 + $0xb8] sm:$0xff]
          %v241 = vld [vmem:[%s203 + $0xc0] sm:$0xff]
          %v242 = vld [vmem:[%s203 + $0xc8] sm:$0xff]
          %v243 = vld [vmem:[%s203 + $0xd0] sm:$0xff]
          %v244 = vld [vmem:[%s203 + $0xd8] sm:$0xff]
          %v245 = vld [vmem:[%s203 + $0xe0] sm:$0xff]
          %v246 = vld [vmem:[%s203 + $0xe8] sm:$0xff]
          %v247 = vld [vmem:[%s203 + $0xf0] sm:$0xff]
          %v248 = vld [vmem:[%s203 + $0xf8] sm:$0xff]
          %v249 = vld [vmem:[%s203 + $0x100] sm:$0xff]
          %v250 = vld [vmem:[%s203 + $0x108] sm:$0xff]
          %v251 = vld [vmem:[%s203 + $0x110] sm:$0xff]
          %v252 = vld [vmem:[%s203 + $0x118] sm:$0xff]
          %v253 = vld [vmem:[%s203 + $0x120] sm:$0xff]
          %v254 = vld [vmem:[%s203 + $0x128] sm:$0xff]
          %v255 = vmul.f32 %v217, %v217
          %v256 = vmul.f32 %v218, %v218
          %v257 = vmul.f32 %v219, %v219
          %v258 = vmul.f32 %v220, %v220
          %v259 = vmul.f32 %v221, %v221
          %v260 = vmul.f32 %v222, %v222
          %v261 = vmul.f32 %v223, %v223
          %v262 = vmul.f32 %v224, %v224
          %v263 = vmul.f32 %v225, %v225
          %v264 = vmul.f32 %v226, %v226
          %v265 = vmul.f32 %v227, %v227
          %v266 = vmul.f32 %v228, %v228
          %v267 = vmul.f32 %v229, %v229
          %v268 = vmul.f32 %v230, %v230
          %v269 = vmul.f32 %v231, %v231
          %v270 = vmul.f32 %v232, %v232
          %v271 = vmul.f32 %v233, %v233
          %v272 = vmul.f32 %v234, %v234
          %v273 = vmul.f32 %v235, %v235
          %v274 = vmul.f32 %v236, %v236
          %v275 = vmul.f32 %v237, %v237
          %v276 = vmul.f32 %v238, %v238
          %v277 = vmul.f32 %v239, %v239
          %v278 = vmul.f32 %v240, %v240
          %v279 = vmul.f32 %v241, %v241
          %v280 = vmul.f32 %v242, %v242
          %v281 = vmul.f32 %v243, %v243
          %v282 = vmul.f32 %v244, %v244
          %v283 = vmul.f32 %v245, %v245
          %v284 = vmul.f32 %v246, %v246
          %v285 = vmul.f32 %v247, %v247
          %v286 = vmul.f32 %v248, %v248
          %v287 = vmul.f32 %v249, %v249
          %v288 = vmul.f32 %v250, %v250
          %v289 = vmul.f32 %v251, %v251
          %v290 = vmul.f32 %v252, %v252
          %v291 = vmul.f32 %v253, %v253
          %v292 = vmul.f32 %v254, %v254
          %vm293 = vcmask 261120
          %v294 = vsel %vm293, %v255, 0.0
          %295 = vadd.xlane.f32.xlu0 %v294
          %v296 = vpop.xlane.xlu0 %295
          %v297 = vsel %vm293, %v256, 0.0
          %298 = vadd.xlane.f32.xlu0 %v297
          %v299 = vpop.xlane.xlu0 %298
          %v300 = vsel %vm293, %v257, 0.0
          %301 = vadd.xlane.f32.xlu0 %v300
          %v302 = vpop.xlane.xlu0 %301
          %v303 = vsel %vm293, %v258, 0.0
          %304 = vadd.xlane.f32.xlu0 %v303
          %v305 = vpop.xlane.xlu0 %304
          %v306 = vsel %vm293, %v259, 0.0
          %307 = vadd.xlane.f32.xlu0 %v306
          %v308 = vpop.xlane.xlu0 %307
          %v309 = vsel %vm293, %v260, 0.0
          %310 = vadd.xlane.f32.xlu0 %v309
          %v311 = vpop.xlane.xlu0 %310
          %v312 = vsel %vm293, %v261, 0.0
          %313 = vadd.xlane.f32.xlu0 %v312
          %v314 = vpop.xlane.xlu0 %313
          %v315 = vsel %vm293, %v262, 0.0
          %316 = vadd.xlane.f32.xlu0 %v315
          %v317 = vpop.xlane.xlu0 %316
          %v318 = vsel %vm293, %v263, 0.0
          %319 = vadd.xlane.f32.xlu0 %v318
          %v320 = vpop.xlane.xlu0 %319
          %v321 = vsel %vm293, %v264, 0.0
          %322 = vadd.xlane.f32.xlu0 %v321
          %v323 = vpop.xlane.xlu0 %322
          %v324 = vsel %vm293, %v265, 0.0
          %325 = vadd.xlane.f32.xlu0 %v324
          %v326 = vpop.xlane.xlu0 %325
          %v327 = vsel %vm293, %v266, 0.0
          %328 = vadd.xlane.f32.xlu0 %v327
          %v329 = vpop.xlane.xlu0 %328
          %v330 = vsel %vm293, %v267, 0.0
          %331 = vadd.xlane.f32.xlu0 %v330
          %v332 = vpop.xlane.xlu0 %331
          %v333 = vsel %vm293, %v268, 0.0
          %334 = vadd.xlane.f32.xlu0 %v333
          %v335 = vpop.xlane.xlu0 %334
          %v336 = vsel %vm293, %v269, 0.0
          %337 = vadd.xlane.f32.xlu0 %v336
          %v338 = vpop.xlane.xlu0 %337
          %v339 = vsel %vm293, %v270, 0.0
          %340 = vadd.xlane.f32.xlu0 %v339
          %v341 = vpop.xlane.xlu0 %340
          %v342 = vsel %vm293, %v271, 0.0
          %343 = vadd.xlane.f32.xlu0 %v342
          %v344 = vpop.xlane.xlu0 %343
          %v345 = vsel %vm293, %v272, 0.0
          %346 = vadd.xlane.f32.xlu0 %v345
          %v347 = vpop.xlane.xlu0 %346
          %v348 = vsel %vm293, %v273, 0.0
          %349 = vadd.xlane.f32.xlu0 %v348
          %v350 = vpop.xlane.xlu0 %349
          %v351 = vsel %vm293, %v274, 0.0
          %352 = vadd.xlane.f32.xlu0 %v351
          %v353 = vpop.xlane.xlu0 %352
          %v354 = vsel %vm293, %v275, 0.0
          %355 = vadd.xlane.f32.xlu0 %v354
          %v356 = vpop.xlane.xlu0 %355
          %v357 = vsel %vm293, %v276, 0.0
          %358 = vadd.xlane.f32.xlu0 %v357
          %v359 = vpop.xlane.xlu0 %358
          %v360 = vsel %vm293, %v277, 0.0
          %361 = vadd.xlane.f32.xlu0 %v360
          %v362 = vpop.xlane.xlu0 %361
          %v363 = vsel %vm293, %v278, 0.0
          %364 = vadd.xlane.f32.xlu0 %v363
          %v365 = vpop.xlane.xlu0 %364
          %v366 = vsel %vm293, %v279, 0.0
          %367 = vadd.xlane.f32.xlu0 %v366
          %v368 = vpop.xlane.xlu0 %367
          %v369 = vsel %vm293, %v280, 0.0
          %370 = vadd.xlane.f32.xlu0 %v369
          %v371 = vpop.xlane.xlu0 %370
          %v372 = vsel %vm293, %v281, 0.0
          %373 = vadd.xlane.f32.xlu0 %v372
          %v374 = vpop.xlane.xlu0 %373
          %v375 = vsel %vm293, %v282, 0.0
          %376 = vadd.xlane.f32.xlu0 %v375
          %v377 = vpop.xlane.xlu0 %376
          %v378 = vsel %vm293, %v283, 0.0
          %379 = vadd.xlane.f32.xlu0 %v378
          %v380 = vpop.xlane.xlu0 %379
          %v381 = vsel %vm293, %v284, 0.0
          %382 = vadd.xlane.f32.xlu0 %v381
          %v383 = vpop.xlane.xlu0 %382
          %v384 = vsel %vm293, %v285, 0.0
          %385 = vadd.xlane.f32.xlu0 %v384
          %v386 = vpop.xlane.xlu0 %385
          %v387 = vsel %vm293, %v286, 0.0
          %388 = vadd.xlane.f32.xlu0 %v387
          %v389 = vpop.xlane.xlu0 %388
          %v390 = vsel %vm293, %v287, 0.0
          %391 = vadd.xlane.f32.xlu0 %v390
          %v392 = vpop.xlane.xlu0 %391
          %v393 = vsel %vm293, %v288, 0.0
          %394 = vadd.xlane.f32.xlu0 %v393
          %v395 = vpop.xlane.xlu0 %394
          %v396 = vsel %vm293, %v289, 0.0
          %397 = vadd.xlane.f32.xlu0 %v396
          %v398 = vpop.xlane.xlu0 %397
          %v399 = vsel %vm293, %v290, 0.0
          %400 = vadd.xlane.f32.xlu0 %v399
          %v401 = vpop.xlane.xlu0 %400
          %v402 = vsel %vm293, %v291, 0.0
          %403 = vadd.xlane.f32.xlu0 %v402
          %v404 = vpop.xlane.xlu0 %403
          %v405 = vsel %vm293, %v292, 0.0
          %406 = vadd.xlane.f32.xlu0 %v405
          %v407 = vpop.xlane.xlu0 %406
          %v408 = vld [vmem:[%s2] sm:$0xff]
          %v409 = vld [vmem:[%s2 + $0x8] sm:$0xff]
          %v410 = vld [vmem:[%s2 + $0x10] sm:$0xff]
          %v411 = vld [vmem:[%s2 + $0x18] sm:$0xff]
          %v413 = vsel %vm293, %v217, 0
          %v416 = vsel %vm293, %v218, 0
          %v419 = vsel %vm293, %v219, 0
          %v422 = vsel %vm293, %v220, 0
          %v425 = vsel %vm293, %v221, 0
          %v428 = vsel %vm293, %v222, 0
          %v431 = vsel %vm293, %v223, 0
          %v434 = vsel %vm293, %v224, 0
          %v437 = vsel %vm293, %v225, 0
          %v440 = vsel %vm293, %v226, 0
          %v443 = vsel %vm293, %v227, 0
          %v446 = vsel %vm293, %v228, 0
          %v449 = vsel %vm293, %v229, 0
          %v452 = vsel %vm293, %v230, 0
          %v455 = vsel %vm293, %v231, 0
          %v458 = vsel %vm293, %v232, 0
          %v461 = vsel %vm293, %v233, 0
          %v464 = vsel %vm293, %v234, 0
          %v467 = vsel %vm293, %v235, 0
          %v470 = vsel %vm293, %v236, 0
          %v473 = vsel %vm293, %v237, 0
          %v476 = vsel %vm293, %v238, 0
          %v479 = vsel %vm293, %v239, 0
          %v482 = vsel %vm293, %v240, 0
          %v485 = vsel %vm293, %v241, 0
          %v488 = vsel %vm293, %v242, 0
          %v491 = vsel %vm293, %v243, 0
          %v494 = vsel %vm293, %v244, 0
          %v497 = vsel %vm293, %v245, 0
          %v500 = vsel %vm293, %v246, 0
          %v503 = vsel %vm293, %v247, 0
          %v506 = vsel %vm293, %v248, 0
          %v509 = vsel %vm293, %v249, 0
          %v512 = vsel %vm293, %v250, 0
          %v515 = vsel %vm293, %v251, 0
          %v518 = vsel %vm293, %v252, 0
          %v521 = vsel %vm293, %v253, 0
          %v524 = vsel %vm293, %v254, 0
          %526 = vmatpush.msra.mxu0 0.0
          %527 = vmatpush.msra.mxu0 0.0
          %528 = vmatpush.msra.mxu0 0.0
          %529 = vmatpush.msra.mxu0 0.0
          %530 = vmatpush.msra.mxu0 0.0
          %531 = vmatpush.msra.mxu0 0.0
          %532 = vmatpush.msra.mxu0 0.0
          %533 = vmatpush.msra.mxu0 0.0
          %534 = vmatpush.msra.mxu0 0.0
          %535 = vmatpush.msra.mxu0 0.0
          %536 = vmatpush.msra.mxu0 0.0
          %537 = vmatpush.msra.mxu0 0.0
          %538 = vmatpush.msra.mxu0 %v411
          %539 = vmatpush.msra.mxu0 %v410
          %540 = vmatpush.msra.mxu0 %v409
          %541 = vmatpush.msra.mxu0 %v408
          %542 = vmatmul.f32.gmra.mxu0 %v413
          %v543 = vpop.f32.mrf.mxu0
          %v544 = vadd.f32 0.0, %v543
          %545 = vmatmul.f32.gmra.mxu0 %v416
          %v546 = vpop.f32.mrf.mxu0
          %v547 = vadd.f32 0.0, %v546
          %548 = vmatmul.f32.gmra.mxu0 %v419
          %v549 = vpop.f32.mrf.mxu0
          %v550 = vadd.f32 0.0, %v549
          %551 = vmatmul.f32.gmra.mxu0 %v422
          %v552 = vpop.f32.mrf.mxu0
          %v553 = vadd.f32 0.0, %v552
          %554 = vmatmul.f32.gmra.mxu0 %v425
          %v555 = vpop.f32.mrf.mxu0
          %v556 = vadd.f32 0.0, %v555
          %557 = vmatmul.f32.gmra.mxu0 %v428
          %v558 = vpop.f32.mrf.mxu0
          %v559 = vadd.f32 0.0, %v558
          %560 = vmatmul.f32.gmra.mxu0 %v431
          %v561 = vpop.f32.mrf.mxu0
          %v562 = vadd.f32 0.0, %v561
          %563 = vmatmul.f32.gmra.mxu0 %v434
          %v564 = vpop.f32.mrf.mxu0
          %v565 = vadd.f32 0.0, %v564
          %566 = vmatmul.f32.gmra.mxu0 %v437
          %v567 = vpop.f32.mrf.mxu0
          %v568 = vadd.f32 0.0, %v567
          %569 = vmatmul.f32.gmra.mxu0 %v440
          %v570 = vpop.f32.mrf.mxu0
          %v571 = vadd.f32 0.0, %v570
          %572 = vmatmul.f32.gmra.mxu0 %v443
          %v573 = vpop.f32.mrf.mxu0
          %v574 = vadd.f32 0.0, %v573
          %575 = vmatmul.f32.gmra.mxu0 %v446
          %v576 = vpop.f32.mrf.mxu0
          %v577 = vadd.f32 0.0, %v576
          %578 = vmatmul.f32.gmra.mxu0 %v449
          %v579 = vpop.f32.mrf.mxu0
          %v580 = vadd.f32 0.0, %v579
          %581 = vmatmul.f32.gmra.mxu0 %v452
          %v582 = vpop.f32.mrf.mxu0
          %v583 = vadd.f32 0.0, %v582
          %584 = vmatmul.f32.gmra.mxu0 %v455
          %v585 = vpop.f32.mrf.mxu0
          %v586 = vadd.f32 0.0, %v585
          %587 = vmatmul.f32.gmra.mxu0 %v458
          %v588 = vpop.f32.mrf.mxu0
          %v589 = vadd.f32 0.0, %v588
          %590 = vmatmul.f32.gmra.mxu0 %v461
          %v591 = vpop.f32.mrf.mxu0
          %v592 = vadd.f32 0.0, %v591
          %593 = vmatmul.f32.gmra.mxu0 %v464
          %v594 = vpop.f32.mrf.mxu0
          %v595 = vadd.f32 0.0, %v594
          %596 = vmatmul.f32.gmra.mxu0 %v467
          %v597 = vpop.f32.mrf.mxu0
          %v598 = vadd.f32 0.0, %v597
          %599 = vmatmul.f32.gmra.mxu0 %v470
          %v600 = vpop.f32.mrf.mxu0
          %v601 = vadd.f32 0.0, %v600
          %602 = vmatmul.f32.gmra.mxu0 %v473
          %v603 = vpop.f32.mrf.mxu0
          %v604 = vadd.f32 0.0, %v603
          %605 = vmatmul.f32.gmra.mxu0 %v476
          %v606 = vpop.f32.mrf.mxu0
          %v607 = vadd.f32 0.0, %v606
          %608 = vmatmul.f32.gmra.mxu0 %v479
          %v609 = vpop.f32.mrf.mxu0
          %v610 = vadd.f32 0.0, %v609
          %611 = vmatmul.f32.gmra.mxu0 %v482
          %v612 = vpop.f32.mrf.mxu0
          %v613 = vadd.f32 0.0, %v612
          %614 = vmatmul.f32.gmra.mxu0 %v485
          %v615 = vpop.f32.mrf.mxu0
          %v616 = vadd.f32 0.0, %v615
          %617 = vmatmul.f32.gmra.mxu0 %v488
          %v618 = vpop.f32.mrf.mxu0
          %v619 = vadd.f32 0.0, %v618
          %620 = vmatmul.f32.gmra.mxu0 %v491
          %v621 = vpop.f32.mrf.mxu0
          %v622 = vadd.f32 0.0, %v621
          %623 = vmatmul.f32.gmra.mxu0 %v494
          %v624 = vpop.f32.mrf.mxu0
          %v625 = vadd.f32 0.0, %v624
          %626 = vmatmul.f32.gmra.mxu0 %v497
          %v627 = vpop.f32.mrf.mxu0
          %v628 = vadd.f32 0.0, %v627
          %629 = vmatmul.f32.gmra.mxu0 %v500
          %v630 = vpop.f32.mrf.mxu0
          %v631 = vadd.f32 0.0, %v630
          %632 = vmatmul.f32.gmra.mxu0 %v503
          %v633 = vpop.f32.mrf.mxu0
          %v634 = vadd.f32 0.0, %v633
          %635 = vmatmul.f32.gmra.mxu0 %v506
          %v636 = vpop.f32.mrf.mxu0
          %v637 = vadd.f32 0.0, %v636
          %638 = vmatmul.f32.gmra.mxu0 %v509
          %v639 = vpop.f32.mrf.mxu0
          %v640 = vadd.f32 0.0, %v639
          %641 = vmatmul.f32.gmra.mxu0 %v512
          %v642 = vpop.f32.mrf.mxu0
          %v643 = vadd.f32 0.0, %v642
          %644 = vmatmul.f32.gmra.mxu0 %v515
          %v645 = vpop.f32.mrf.mxu0
          %v646 = vadd.f32 0.0, %v645
          %647 = vmatmul.f32.gmra.mxu0 %v518
          %v648 = vpop.f32.mrf.mxu0
          %v649 = vadd.f32 0.0, %v648
          %650 = vmatmul.f32.gmra.mxu0 %v521
          %v651 = vpop.f32.mrf.mxu0
          %v652 = vadd.f32 0.0, %v651
          %653 = vmatmul.f32.gmra.mxu0 %v524
          %v654 = vpop.f32.mrf.mxu0
          %v655 = vadd.f32 0.0, %v654
          %656 = vdwg.mxu0
          %v657 = vld [vmem:[%s3] sm:$0x1]
          %v659 = vperm.slane %v657, 0
          %v661 = vadd.f32 %v296, %v659
          %v662 = vadd.f32 %v299, %v659
          %v663 = vadd.f32 %v302, %v659
          %v664 = vadd.f32 %v305, %v659
          %v665 = vadd.f32 %v308, %v659
          %v666 = vadd.f32 %v311, %v659
          %v667 = vadd.f32 %v314, %v659
          %v668 = vadd.f32 %v317, %v659
          %v669 = vadd.f32 %v320, %v659
          %v670 = vadd.f32 %v323, %v659
          %v671 = vadd.f32 %v326, %v659
          %v672 = vadd.f32 %v329, %v659
          %v673 = vadd.f32 %v332, %v659
          %v674 = vadd.f32 %v335, %v659
          %v675 = vadd.f32 %v338, %v659
          %v676 = vadd.f32 %v341, %v659
          %v677 = vadd.f32 %v344, %v659
          %v678 = vadd.f32 %v347, %v659
          %v679 = vadd.f32 %v350, %v659
          %v680 = vadd.f32 %v353, %v659
          %v681 = vadd.f32 %v356, %v659
          %v682 = vadd.f32 %v359, %v659
          %v683 = vadd.f32 %v362, %v659
          %v684 = vadd.f32 %v365, %v659
          %v685 = vadd.f32 %v368, %v659
          %v686 = vadd.f32 %v371, %v659
          %v687 = vadd.f32 %v374, %v659
          %v688 = vadd.f32 %v377, %v659
          %v689 = vadd.f32 %v380, %v659
          %v690 = vadd.f32 %v383, %v659
          %v691 = vadd.f32 %v386, %v659
          %v692 = vadd.f32 %v389, %v659
          %v693 = vadd.f32 %v392, %v659
          %v694 = vadd.f32 %v395, %v659
          %v695 = vadd.f32 %v398, %v659
          %v696 = vadd.f32 %v401, %v659
          %v697 = vadd.f32 %v404, %v659
          %v698 = vadd.f32 %v407, %v659
          %v699 = vmul.f32 %v544, 2.0
          %v700 = vmul.f32 %v547, 2.0
          %v701 = vmul.f32 %v550, 2.0
          %v702 = vmul.f32 %v553, 2.0
          %v703 = vmul.f32 %v556, 2.0
          %v704 = vmul.f32 %v559, 2.0
          %v705 = vmul.f32 %v562, 2.0
          %v706 = vmul.f32 %v565, 2.0
          %v707 = vmul.f32 %v568, 2.0
          %v708 = vmul.f32 %v571, 2.0
          %v709 = vmul.f32 %v574, 2.0
          %v710 = vmul.f32 %v577, 2.0
          %v711 = vmul.f32 %v580, 2.0
          %v712 = vmul.f32 %v583, 2.0
          %v713 = vmul.f32 %v586, 2.0
          %v714 = vmul.f32 %v589, 2.0
          %v715 = vmul.f32 %v592, 2.0
          %v716 = vmul.f32 %v595, 2.0
          %v717 = vmul.f32 %v598, 2.0
          %v718 = vmul.f32 %v601, 2.0
          %v719 = vmul.f32 %v604, 2.0
          %v720 = vmul.f32 %v607, 2.0
          %v721 = vmul.f32 %v610, 2.0
          %v722 = vmul.f32 %v613, 2.0
          %v723 = vmul.f32 %v616, 2.0
          %v724 = vmul.f32 %v619, 2.0
          %v725 = vmul.f32 %v622, 2.0
          %v726 = vmul.f32 %v625, 2.0
          %v727 = vmul.f32 %v628, 2.0
          %v728 = vmul.f32 %v631, 2.0
          %v729 = vmul.f32 %v634, 2.0
          %v730 = vmul.f32 %v637, 2.0
          %v731 = vmul.f32 %v640, 2.0
          %v732 = vmul.f32 %v643, 2.0
          %v733 = vmul.f32 %v646, 2.0
          %v734 = vmul.f32 %v649, 2.0
          %v735 = vmul.f32 %v652, 2.0
          %v736 = vmul.f32 %v655, 2.0
          %v737 = vsub.f32 %v661, %v699
          %v738 = vsub.f32 %v662, %v700
          %v739 = vsub.f32 %v663, %v701
          %v740 = vsub.f32 %v664, %v702
          %v741 = vsub.f32 %v665, %v703
          %v742 = vsub.f32 %v666, %v704
          %v743 = vsub.f32 %v667, %v705
          %v744 = vsub.f32 %v668, %v706
          %v745 = vsub.f32 %v669, %v707
          %v746 = vsub.f32 %v670, %v708
          %v747 = vsub.f32 %v671, %v709
          %v748 = vsub.f32 %v672, %v710
          %v749 = vsub.f32 %v673, %v711
          %v750 = vsub.f32 %v674, %v712
          %v751 = vsub.f32 %v675, %v713
          %v752 = vsub.f32 %v676, %v714
          %v753 = vsub.f32 %v677, %v715
          %v754 = vsub.f32 %v678, %v716
          %v755 = vsub.f32 %v679, %v717
          %v756 = vsub.f32 %v680, %v718
          %v757 = vsub.f32 %v681, %v719
          %v758 = vsub.f32 %v682, %v720
          %v759 = vsub.f32 %v683, %v721
          %v760 = vsub.f32 %v684, %v722
          %v761 = vsub.f32 %v685, %v723
          %v762 = vsub.f32 %v686, %v724
          %v763 = vsub.f32 %v687, %v725
          %v764 = vsub.f32 %v688, %v726
          %v765 = vsub.f32 %v689, %v727
          %v766 = vsub.f32 %v690, %v728
          %v767 = vsub.f32 %v691, %v729
          %v768 = vsub.f32 %v692, %v730
          %v769 = vsub.f32 %v693, %v731
          %v770 = vsub.f32 %v694, %v732
          %v771 = vsub.f32 %v695, %v733
          %v772 = vsub.f32 %v696, %v734
          %v773 = vsub.f32 %v697, %v735
          %v774 = vsub.f32 %v698, %v736
          %v775 = vmax.f32 %v737, 0.0
          %v776 = vmax.f32 %v738, 0.0
          %v777 = vmax.f32 %v739, 0.0
          %v778 = vmax.f32 %v740, 0.0
          %v779 = vmax.f32 %v741, 0.0
          %v780 = vmax.f32 %v742, 0.0
          %v781 = vmax.f32 %v743, 0.0
          %v782 = vmax.f32 %v744, 0.0
          %v783 = vmax.f32 %v745, 0.0
          %v784 = vmax.f32 %v746, 0.0
          %v785 = vmax.f32 %v747, 0.0
          %v786 = vmax.f32 %v748, 0.0
          %v787 = vmax.f32 %v749, 0.0
          %v788 = vmax.f32 %v750, 0.0
          %v789 = vmax.f32 %v751, 0.0
          %v790 = vmax.f32 %v752, 0.0
          %v791 = vmax.f32 %v753, 0.0
          %v792 = vmax.f32 %v754, 0.0
          %v793 = vmax.f32 %v755, 0.0
          %v794 = vmax.f32 %v756, 0.0
          %v795 = vmax.f32 %v757, 0.0
          %v796 = vmax.f32 %v758, 0.0
          %v797 = vmax.f32 %v759, 0.0
          %v798 = vmax.f32 %v760, 0.0
          %v799 = vmax.f32 %v761, 0.0
          %v800 = vmax.f32 %v762, 0.0
          %v801 = vmax.f32 %v763, 0.0
          %v802 = vmax.f32 %v764, 0.0
          %v803 = vmax.f32 %v765, 0.0
          %v804 = vmax.f32 %v766, 0.0
          %v805 = vmax.f32 %v767, 0.0
          %v806 = vmax.f32 %v768, 0.0
          %v807 = vmax.f32 %v769, 0.0
          %v808 = vmax.f32 %v770, 0.0
          %v809 = vmax.f32 %v771, 0.0
          %v810 = vmax.f32 %v772, 0.0
          %v811 = vmax.f32 %v773, 0.0
          %v812 = vmax.f32 %v774, 0.0
          %v813 = vrsqrt.pop %v775
          %v814 = vmul.f32 %v813, %v775
          %v815 = vmul.f32 %v814, %v813
          %v816 = vmul.f32 0.5, %v815
          %v817 = vsub.f32 1.5, %v816
          %v818 = vmul.f32 %v813, %v817
          %v819 = vmul.f32 %v775, %v818
          %vm820 = vcmp.eq.f32.partialorder %v775, inf
          %v821 = vsel %vm820, %v775, %v819
          %vm822 = vcmp.eq.f32.partialorder %v775, 0.0
          %v823 = vand.u32 %v775, 2147483648
          %v824 = vsel %vm822, %v823, %v821
          %v825 = vrsqrt.pop %v776
          %v826 = vmul.f32 %v825, %v776
          %v827 = vmul.f32 %v826, %v825
          %v828 = vmul.f32 0.5, %v827
          %v829 = vsub.f32 1.5, %v828
          %v830 = vmul.f32 %v825, %v829
          %v831 = vmul.f32 %v776, %v830
          %vm832 = vcmp.eq.f32.partialorder %v776, inf
          %v833 = vsel %vm832, %v776, %v831
          %vm834 = vcmp.eq.f32.partialorder %v776, 0.0
          %v835 = vand.u32 %v776, 2147483648
          %v836 = vsel %vm834, %v835, %v833
          %v837 = vrsqrt.pop %v777
          %v838 = vmul.f32 %v837, %v777
          %v839 = vmul.f32 %v838, %v837
          %v840 = vmul.f32 0.5, %v839
          %v841 = vsub.f32 1.5, %v840
          %v842 = vmul.f32 %v837, %v841
          %v843 = vmul.f32 %v777, %v842
          %vm844 = vcmp.eq.f32.partialorder %v777, inf
          %v845 = vsel %vm844, %v777, %v843
          %vm846 = vcmp.eq.f32.partialorder %v777, 0.0
          %v847 = vand.u32 %v777, 2147483648
          %v848 = vsel %vm846, %v847, %v845
          %v849 = vrsqrt.pop %v778
          %v850 = vmul.f32 %v849, %v778
          %v851 = vmul.f32 %v850, %v849
          %v852 = vmul.f32 0.5, %v851
          %v853 = vsub.f32 1.5, %v852
          %v854 = vmul.f32 %v849, %v853
          %v855 = vmul.f32 %v778, %v854
          %vm856 = vcmp.eq.f32.partialorder %v778, inf
          %v857 = vsel %vm856, %v778, %v855
          %vm858 = vcmp.eq.f32.partialorder %v778, 0.0
          %v859 = vand.u32 %v778, 2147483648
          %v860 = vsel %vm858, %v859, %v857
          %v861 = vrsqrt.pop %v779
          %v862 = vmul.f32 %v861, %v779
          %v863 = vmul.f32 %v862, %v861
          %v864 = vmul.f32 0.5, %v863
          %v865 = vsub.f32 1.5, %v864
          %v866 = vmul.f32 %v861, %v865
          %v867 = vmul.f32 %v779, %v866
          %vm868 = vcmp.eq.f32.partialorder %v779, inf
          %v869 = vsel %vm868, %v779, %v867
          %vm870 = vcmp.eq.f32.partialorder %v779, 0.0
          %v871 = vand.u32 %v779, 2147483648
          %v872 = vsel %vm870, %v871, %v869
          %v873 = vrsqrt.pop %v780
          %v874 = vmul.f32 %v873, %v780
          %v875 = vmul.f32 %v874, %v873
          %v876 = vmul.f32 0.5, %v875
          %v877 = vsub.f32 1.5, %v876
          %v878 = vmul.f32 %v873, %v877
          %v879 = vmul.f32 %v780, %v878
          %vm880 = vcmp.eq.f32.partialorder %v780, inf
          %v881 = vsel %vm880, %v780, %v879
          %vm882 = vcmp.eq.f32.partialorder %v780, 0.0
          %v883 = vand.u32 %v780, 2147483648
          %v884 = vsel %vm882, %v883, %v881
          %v885 = vrsqrt.pop %v781
          %v886 = vmul.f32 %v885, %v781
          %v887 = vmul.f32 %v886, %v885
          %v888 = vmul.f32 0.5, %v887
          %v889 = vsub.f32 1.5, %v888
          %v890 = vmul.f32 %v885, %v889
          %v891 = vmul.f32 %v781, %v890
          %vm892 = vcmp.eq.f32.partialorder %v781, inf
          %v893 = vsel %vm892, %v781, %v891
          %vm894 = vcmp.eq.f32.partialorder %v781, 0.0
          %v895 = vand.u32 %v781, 2147483648
          %v896 = vsel %vm894, %v895, %v893
          %v897 = vrsqrt.pop %v782
          %v898 = vmul.f32 %v897, %v782
          %v899 = vmul.f32 %v898, %v897
          %v900 = vmul.f32 0.5, %v899
          %v901 = vsub.f32 1.5, %v900
          %v902 = vmul.f32 %v897, %v901
          %v903 = vmul.f32 %v782, %v902
          %vm904 = vcmp.eq.f32.partialorder %v782, inf
          %v905 = vsel %vm904, %v782, %v903
          %vm906 = vcmp.eq.f32.partialorder %v782, 0.0
          %v907 = vand.u32 %v782, 2147483648
          %v908 = vsel %vm906, %v907, %v905
          %v909 = vrsqrt.pop %v783
          %v910 = vmul.f32 %v909, %v783
          %v911 = vmul.f32 %v910, %v909
          %v912 = vmul.f32 0.5, %v911
          %v913 = vsub.f32 1.5, %v912
          %v914 = vmul.f32 %v909, %v913
          %v915 = vmul.f32 %v783, %v914
          %vm916 = vcmp.eq.f32.partialorder %v783, inf
          %v917 = vsel %vm916, %v783, %v915
          %vm918 = vcmp.eq.f32.partialorder %v783, 0.0
          %v919 = vand.u32 %v783, 2147483648
          %v920 = vsel %vm918, %v919, %v917
          %v921 = vrsqrt.pop %v784
          %v922 = vmul.f32 %v921, %v784
          %v923 = vmul.f32 %v922, %v921
          %v924 = vmul.f32 0.5, %v923
          %v925 = vsub.f32 1.5, %v924
          %v926 = vmul.f32 %v921, %v925
          %v927 = vmul.f32 %v784, %v926
          %vm928 = vcmp.eq.f32.partialorder %v784, inf
          %v929 = vsel %vm928, %v784, %v927
          %vm930 = vcmp.eq.f32.partialorder %v784, 0.0
          %v931 = vand.u32 %v784, 2147483648
          %v932 = vsel %vm930, %v931, %v929
          %v933 = vrsqrt.pop %v785
          %v934 = vmul.f32 %v933, %v785
          %v935 = vmul.f32 %v934, %v933
          %v936 = vmul.f32 0.5, %v935
          %v937 = vsub.f32 1.5, %v936
          %v938 = vmul.f32 %v933, %v937
          %v939 = vmul.f32 %v785, %v938
          %vm940 = vcmp.eq.f32.partialorder %v785, inf
          %v941 = vsel %vm940, %v785, %v939
          %vm942 = vcmp.eq.f32.partialorder %v785, 0.0
          %v943 = vand.u32 %v785, 2147483648
          %v944 = vsel %vm942, %v943, %v941
          %v945 = vrsqrt.pop %v786
          %v946 = vmul.f32 %v945, %v786
          %v947 = vmul.f32 %v946, %v945
          %v948 = vmul.f32 0.5, %v947
          %v949 = vsub.f32 1.5, %v948
          %v950 = vmul.f32 %v945, %v949
          %v951 = vmul.f32 %v786, %v950
          %vm952 = vcmp.eq.f32.partialorder %v786, inf
          %v953 = vsel %vm952, %v786, %v951
          %vm954 = vcmp.eq.f32.partialorder %v786, 0.0
          %v955 = vand.u32 %v786, 2147483648
          %v956 = vsel %vm954, %v955, %v953
          %v957 = vrsqrt.pop %v787
          %v958 = vmul.f32 %v957, %v787
          %v959 = vmul.f32 %v958, %v957
          %v960 = vmul.f32 0.5, %v959
          %v961 = vsub.f32 1.5, %v960
          %v962 = vmul.f32 %v957, %v961
          %v963 = vmul.f32 %v787, %v962
          %vm964 = vcmp.eq.f32.partialorder %v787, inf
          %v965 = vsel %vm964, %v787, %v963
          %vm966 = vcmp.eq.f32.partialorder %v787, 0.0
          %v967 = vand.u32 %v787, 2147483648
          %v968 = vsel %vm966, %v967, %v965
          %v969 = vrsqrt.pop %v788
          %v970 = vmul.f32 %v969, %v788
          %v971 = vmul.f32 %v970, %v969
          %v972 = vmul.f32 0.5, %v971
          %v973 = vsub.f32 1.5, %v972
          %v974 = vmul.f32 %v969, %v973
          %v975 = vmul.f32 %v788, %v974
          %vm976 = vcmp.eq.f32.partialorder %v788, inf
          %v977 = vsel %vm976, %v788, %v975
          %vm978 = vcmp.eq.f32.partialorder %v788, 0.0
          %v979 = vand.u32 %v788, 2147483648
          %v980 = vsel %vm978, %v979, %v977
          %v981 = vrsqrt.pop %v789
          %v982 = vmul.f32 %v981, %v789
          %v983 = vmul.f32 %v982, %v981
          %v984 = vmul.f32 0.5, %v983
          %v985 = vsub.f32 1.5, %v984
          %v986 = vmul.f32 %v981, %v985
          %v987 = vmul.f32 %v789, %v986
          %vm988 = vcmp.eq.f32.partialorder %v789, inf
          %v989 = vsel %vm988, %v789, %v987
          %vm990 = vcmp.eq.f32.partialorder %v789, 0.0
          %v991 = vand.u32 %v789, 2147483648
          %v992 = vsel %vm990, %v991, %v989
          %v993 = vrsqrt.pop %v790
          %v994 = vmul.f32 %v993, %v790
          %v995 = vmul.f32 %v994, %v993
          %v996 = vmul.f32 0.5, %v995
          %v997 = vsub.f32 1.5, %v996
          %v998 = vmul.f32 %v993, %v997
          %v999 = vmul.f32 %v790, %v998
          %vm1000 = vcmp.eq.f32.partialorder %v790, inf
          %v1001 = vsel %vm1000, %v790, %v999
          %vm1002 = vcmp.eq.f32.partialorder %v790, 0.0
          %v1003 = vand.u32 %v790, 2147483648
          %v1004 = vsel %vm1002, %v1003, %v1001
          %v1005 = vrsqrt.pop %v791
          %v1006 = vmul.f32 %v1005, %v791
          %v1007 = vmul.f32 %v1006, %v1005
          %v1008 = vmul.f32 0.5, %v1007
          %v1009 = vsub.f32 1.5, %v1008
          %v1010 = vmul.f32 %v1005, %v1009
          %v1011 = vmul.f32 %v791, %v1010
          %vm1012 = vcmp.eq.f32.partialorder %v791, inf
          %v1013 = vsel %vm1012, %v791, %v1011
          %vm1014 = vcmp.eq.f32.partialorder %v791, 0.0
          %v1015 = vand.u32 %v791, 2147483648
          %v1016 = vsel %vm1014, %v1015, %v1013
          %v1017 = vrsqrt.pop %v792
          %v1018 = vmul.f32 %v1017, %v792
          %v1019 = vmul.f32 %v1018, %v1017
          %v1020 = vmul.f32 0.5, %v1019
          %v1021 = vsub.f32 1.5, %v1020
          %v1022 = vmul.f32 %v1017, %v1021
          %v1023 = vmul.f32 %v792, %v1022
          %vm1024 = vcmp.eq.f32.partialorder %v792, inf
          %v1025 = vsel %vm1024, %v792, %v1023
          %vm1026 = vcmp.eq.f32.partialorder %v792, 0.0
          %v1027 = vand.u32 %v792, 2147483648
          %v1028 = vsel %vm1026, %v1027, %v1025
          %v1029 = vrsqrt.pop %v793
          %v1030 = vmul.f32 %v1029, %v793
          %v1031 = vmul.f32 %v1030, %v1029
          %v1032 = vmul.f32 0.5, %v1031
          %v1033 = vsub.f32 1.5, %v1032
          %v1034 = vmul.f32 %v1029, %v1033
          %v1035 = vmul.f32 %v793, %v1034
          %vm1036 = vcmp.eq.f32.partialorder %v793, inf
          %v1037 = vsel %vm1036, %v793, %v1035
          %vm1038 = vcmp.eq.f32.partialorder %v793, 0.0
          %v1039 = vand.u32 %v793, 2147483648
          %v1040 = vsel %vm1038, %v1039, %v1037
          %v1041 = vrsqrt.pop %v794
          %v1042 = vmul.f32 %v1041, %v794
          %v1043 = vmul.f32 %v1042, %v1041
          %v1044 = vmul.f32 0.5, %v1043
          %v1045 = vsub.f32 1.5, %v1044
          %v1046 = vmul.f32 %v1041, %v1045
          %v1047 = vmul.f32 %v794, %v1046
          %vm1048 = vcmp.eq.f32.partialorder %v794, inf
          %v1049 = vsel %vm1048, %v794, %v1047
          %vm1050 = vcmp.eq.f32.partialorder %v794, 0.0
          %v1051 = vand.u32 %v794, 2147483648
          %v1052 = vsel %vm1050, %v1051, %v1049
          %v1053 = vrsqrt.pop %v795
          %v1054 = vmul.f32 %v1053, %v795
          %v1055 = vmul.f32 %v1054, %v1053
          %v1056 = vmul.f32 0.5, %v1055
          %v1057 = vsub.f32 1.5, %v1056
          %v1058 = vmul.f32 %v1053, %v1057
          %v1059 = vmul.f32 %v795, %v1058
          %vm1060 = vcmp.eq.f32.partialorder %v795, inf
          %v1061 = vsel %vm1060, %v795, %v1059
          %vm1062 = vcmp.eq.f32.partialorder %v795, 0.0
          %v1063 = vand.u32 %v795, 2147483648
          %v1064 = vsel %vm1062, %v1063, %v1061
          %v1065 = vrsqrt.pop %v796
          %v1066 = vmul.f32 %v1065, %v796
          %v1067 = vmul.f32 %v1066, %v1065
          %v1068 = vmul.f32 0.5, %v1067
          %v1069 = vsub.f32 1.5, %v1068
          %v1070 = vmul.f32 %v1065, %v1069
          %v1071 = vmul.f32 %v796, %v1070
          %vm1072 = vcmp.eq.f32.partialorder %v796, inf
          %v1073 = vsel %vm1072, %v796, %v1071
          %vm1074 = vcmp.eq.f32.partialorder %v796, 0.0
          %v1075 = vand.u32 %v796, 2147483648
          %v1076 = vsel %vm1074, %v1075, %v1073
          %v1077 = vrsqrt.pop %v797
          %v1078 = vmul.f32 %v1077, %v797
          %v1079 = vmul.f32 %v1078, %v1077
          %v1080 = vmul.f32 0.5, %v1079
          %v1081 = vsub.f32 1.5, %v1080
          %v1082 = vmul.f32 %v1077, %v1081
          %v1083 = vmul.f32 %v797, %v1082
          %vm1084 = vcmp.eq.f32.partialorder %v797, inf
          %v1085 = vsel %vm1084, %v797, %v1083
          %vm1086 = vcmp.eq.f32.partialorder %v797, 0.0
          %v1087 = vand.u32 %v797, 2147483648
          %v1088 = vsel %vm1086, %v1087, %v1085
          %v1089 = vrsqrt.pop %v798
          %v1090 = vmul.f32 %v1089, %v798
          %v1091 = vmul.f32 %v1090, %v1089
          %v1092 = vmul.f32 0.5, %v1091
          %v1093 = vsub.f32 1.5, %v1092
          %v1094 = vmul.f32 %v1089, %v1093
          %v1095 = vmul.f32 %v798, %v1094
          %vm1096 = vcmp.eq.f32.partialorder %v798, inf
          %v1097 = vsel %vm1096, %v798, %v1095
          %vm1098 = vcmp.eq.f32.partialorder %v798, 0.0
          %v1099 = vand.u32 %v798, 2147483648
          %v1100 = vsel %vm1098, %v1099, %v1097
          %v1101 = vrsqrt.pop %v799
          %v1102 = vmul.f32 %v1101, %v799
          %v1103 = vmul.f32 %v1102, %v1101
          %v1104 = vmul.f32 0.5, %v1103
          %v1105 = vsub.f32 1.5, %v1104
          %v1106 = vmul.f32 %v1101, %v1105
          %v1107 = vmul.f32 %v799, %v1106
          %vm1108 = vcmp.eq.f32.partialorder %v799, inf
          %v1109 = vsel %vm1108, %v799, %v1107
          %vm1110 = vcmp.eq.f32.partialorder %v799, 0.0
          %v1111 = vand.u32 %v799, 2147483648
          %v1112 = vsel %vm1110, %v1111, %v1109
          %v1113 = vrsqrt.pop %v800
          %v1114 = vmul.f32 %v1113, %v800
          %v1115 = vmul.f32 %v1114, %v1113
          %v1116 = vmul.f32 0.5, %v1115
          %v1117 = vsub.f32 1.5, %v1116
          %v1118 = vmul.f32 %v1113, %v1117
          %v1119 = vmul.f32 %v800, %v1118
          %vm1120 = vcmp.eq.f32.partialorder %v800, inf
          %v1121 = vsel %vm1120, %v800, %v1119
          %vm1122 = vcmp.eq.f32.partialorder %v800, 0.0
          %v1123 = vand.u32 %v800, 2147483648
          %v1124 = vsel %vm1122, %v1123, %v1121
          %v1125 = vrsqrt.pop %v801
          %v1126 = vmul.f32 %v1125, %v801
          %v1127 = vmul.f32 %v1126, %v1125
          %v1128 = vmul.f32 0.5, %v1127
          %v1129 = vsub.f32 1.5, %v1128
          %v1130 = vmul.f32 %v1125, %v1129
          %v1131 = vmul.f32 %v801, %v1130
          %vm1132 = vcmp.eq.f32.partialorder %v801, inf
          %v1133 = vsel %vm1132, %v801, %v1131
          %vm1134 = vcmp.eq.f32.partialorder %v801, 0.0
          %v1135 = vand.u32 %v801, 2147483648
          %v1136 = vsel %vm1134, %v1135, %v1133
          %v1137 = vrsqrt.pop %v802
          %v1138 = vmul.f32 %v1137, %v802
          %v1139 = vmul.f32 %v1138, %v1137
          %v1140 = vmul.f32 0.5, %v1139
          %v1141 = vsub.f32 1.5, %v1140
          %v1142 = vmul.f32 %v1137, %v1141
          %v1143 = vmul.f32 %v802, %v1142
          %vm1144 = vcmp.eq.f32.partialorder %v802, inf
          %v1145 = vsel %vm1144, %v802, %v1143
          %vm1146 = vcmp.eq.f32.partialorder %v802, 0.0
          %v1147 = vand.u32 %v802, 2147483648
          %v1148 = vsel %vm1146, %v1147, %v1145
          %v1149 = vrsqrt.pop %v803
          %v1150 = vmul.f32 %v1149, %v803
          %v1151 = vmul.f32 %v1150, %v1149
          %v1152 = vmul.f32 0.5, %v1151
          %v1153 = vsub.f32 1.5, %v1152
          %v1154 = vmul.f32 %v1149, %v1153
          %v1155 = vmul.f32 %v803, %v1154
          %vm1156 = vcmp.eq.f32.partialorder %v803, inf
          %v1157 = vsel %vm1156, %v803, %v1155
          %vm1158 = vcmp.eq.f32.partialorder %v803, 0.0
          %v1159 = vand.u32 %v803, 2147483648
          %v1160 = vsel %vm1158, %v1159, %v1157
          %v1161 = vrsqrt.pop %v804
          %v1162 = vmul.f32 %v1161, %v804
          %v1163 = vmul.f32 %v1162, %v1161
          %v1164 = vmul.f32 0.5, %v1163
          %v1165 = vsub.f32 1.5, %v1164
          %v1166 = vmul.f32 %v1161, %v1165
          %v1167 = vmul.f32 %v804, %v1166
          %vm1168 = vcmp.eq.f32.partialorder %v804, inf
          %v1169 = vsel %vm1168, %v804, %v1167
          %vm1170 = vcmp.eq.f32.partialorder %v804, 0.0
          %v1171 = vand.u32 %v804, 2147483648
          %v1172 = vsel %vm1170, %v1171, %v1169
          %v1173 = vrsqrt.pop %v805
          %v1174 = vmul.f32 %v1173, %v805
          %v1175 = vmul.f32 %v1174, %v1173
          %v1176 = vmul.f32 0.5, %v1175
          %v1177 = vsub.f32 1.5, %v1176
          %v1178 = vmul.f32 %v1173, %v1177
          %v1179 = vmul.f32 %v805, %v1178
          %vm1180 = vcmp.eq.f32.partialorder %v805, inf
          %v1181 = vsel %vm1180, %v805, %v1179
          %vm1182 = vcmp.eq.f32.partialorder %v805, 0.0
          %v1183 = vand.u32 %v805, 2147483648
          %v1184 = vsel %vm1182, %v1183, %v1181
          %v1185 = vrsqrt.pop %v806
          %v1186 = vmul.f32 %v1185, %v806
          %v1187 = vmul.f32 %v1186, %v1185
          %v1188 = vmul.f32 0.5, %v1187
          %v1189 = vsub.f32 1.5, %v1188
          %v1190 = vmul.f32 %v1185, %v1189
          %v1191 = vmul.f32 %v806, %v1190
          %vm1192 = vcmp.eq.f32.partialorder %v806, inf
          %v1193 = vsel %vm1192, %v806, %v1191
          %vm1194 = vcmp.eq.f32.partialorder %v806, 0.0
          %v1195 = vand.u32 %v806, 2147483648
          %v1196 = vsel %vm1194, %v1195, %v1193
          %v1197 = vrsqrt.pop %v807
          %v1198 = vmul.f32 %v1197, %v807
          %v1199 = vmul.f32 %v1198, %v1197
          %v1200 = vmul.f32 0.5, %v1199
          %v1201 = vsub.f32 1.5, %v1200
          %v1202 = vmul.f32 %v1197, %v1201
          %v1203 = vmul.f32 %v807, %v1202
          %vm1204 = vcmp.eq.f32.partialorder %v807, inf
          %v1205 = vsel %vm1204, %v807, %v1203
          %vm1206 = vcmp.eq.f32.partialorder %v807, 0.0
          %v1207 = vand.u32 %v807, 2147483648
          %v1208 = vsel %vm1206, %v1207, %v1205
          %v1209 = vrsqrt.pop %v808
          %v1210 = vmul.f32 %v1209, %v808
          %v1211 = vmul.f32 %v1210, %v1209
          %v1212 = vmul.f32 0.5, %v1211
          %v1213 = vsub.f32 1.5, %v1212
          %v1214 = vmul.f32 %v1209, %v1213
          %v1215 = vmul.f32 %v808, %v1214
          %vm1216 = vcmp.eq.f32.partialorder %v808, inf
          %v1217 = vsel %vm1216, %v808, %v1215
          %vm1218 = vcmp.eq.f32.partialorder %v808, 0.0
          %v1219 = vand.u32 %v808, 2147483648
          %v1220 = vsel %vm1218, %v1219, %v1217
          %v1221 = vrsqrt.pop %v809
          %v1222 = vmul.f32 %v1221, %v809
          %v1223 = vmul.f32 %v1222, %v1221
          %v1224 = vmul.f32 0.5, %v1223
          %v1225 = vsub.f32 1.5, %v1224
          %v1226 = vmul.f32 %v1221, %v1225
          %v1227 = vmul.f32 %v809, %v1226
          %vm1228 = vcmp.eq.f32.partialorder %v809, inf
          %v1229 = vsel %vm1228, %v809, %v1227
          %vm1230 = vcmp.eq.f32.partialorder %v809, 0.0
          %v1231 = vand.u32 %v809, 2147483648
          %v1232 = vsel %vm1230, %v1231, %v1229
          %v1233 = vrsqrt.pop %v810
          %v1234 = vmul.f32 %v1233, %v810
          %v1235 = vmul.f32 %v1234, %v1233
          %v1236 = vmul.f32 0.5, %v1235
          %v1237 = vsub.f32 1.5, %v1236
          %v1238 = vmul.f32 %v1233, %v1237
          %v1239 = vmul.f32 %v810, %v1238
          %vm1240 = vcmp.eq.f32.partialorder %v810, inf
          %v1241 = vsel %vm1240, %v810, %v1239
          %vm1242 = vcmp.eq.f32.partialorder %v810, 0.0
          %v1243 = vand.u32 %v810, 2147483648
          %v1244 = vsel %vm1242, %v1243, %v1241
          %v1245 = vrsqrt.pop %v811
          %v1246 = vmul.f32 %v1245, %v811
          %v1247 = vmul.f32 %v1246, %v1245
          %v1248 = vmul.f32 0.5, %v1247
          %v1249 = vsub.f32 1.5, %v1248
          %v1250 = vmul.f32 %v1245, %v1249
          %v1251 = vmul.f32 %v811, %v1250
          %vm1252 = vcmp.eq.f32.partialorder %v811, inf
          %v1253 = vsel %vm1252, %v811, %v1251
          %vm1254 = vcmp.eq.f32.partialorder %v811, 0.0
          %v1255 = vand.u32 %v811, 2147483648
          %v1256 = vsel %vm1254, %v1255, %v1253
          %v1257 = vrsqrt.pop %v812
          %v1258 = vmul.f32 %v1257, %v812
          %v1259 = vmul.f32 %v1258, %v1257
          %v1260 = vmul.f32 0.5, %v1259
          %v1261 = vsub.f32 1.5, %v1260
          %v1262 = vmul.f32 %v1257, %v1261
          %v1263 = vmul.f32 %v812, %v1262
          %vm1264 = vcmp.eq.f32.partialorder %v812, inf
          %v1265 = vsel %vm1264, %v812, %v1263
          %vm1266 = vcmp.eq.f32.partialorder %v812, 0.0
          %v1267 = vand.u32 %v812, 2147483648
          %v1268 = vsel %vm1266, %v1267, %v1265
          %s1269 = sadd.s32 %s206, 304
          %p1270 = scmp.le.s32.totalorder %s1269, %s205
          // Predicated region
          $region41: #{tpu_custom_call.1} parent=39 // pred_check
            %p1271 = pneg %p1270
          $region42: #{tpu_custom_call.1} parent=39 // pred_check_branch
            %1273 = sbr.rel (%p1271) target = $region44
          $region43: #{tpu_custom_call.1} parent=39 // pred_region
            %v1274 = vld [vmem:[#allocation2] sm:$0x1]
            %vm1275 = vcmask 130048
            %v1276 = vsel %vm1275, %v824, 0.0
            %v1277 = vsel %vm1275, %v836, 0.0
            %v1278 = vadd.f32 %v1276, %v1277
            %v1279 = vsel %vm1275, %v848, 0.0
            %v1280 = vadd.f32 %v1278, %v1279
            %v1281 = vsel %vm1275, %v860, 0.0
            %v1282 = vadd.f32 %v1280, %v1281
            %v1283 = vsel %vm1275, %v872, 0.0
            %v1284 = vadd.f32 %v1282, %v1283
            %v1285 = vsel %vm1275, %v884, 0.0
            %v1286 = vadd.f32 %v1284, %v1285
            %v1287 = vsel %vm1275, %v896, 0.0
            %v1288 = vadd.f32 %v1286, %v1287
            %v1289 = vsel %vm1275, %v908, 0.0
            %v1290 = vadd.f32 %v1288, %v1289
            %v1291 = vsel %vm1275, %v920, 0.0
            %v1292 = vadd.f32 %v1290, %v1291
            %v1293 = vsel %vm1275, %v932, 0.0
            %v1294 = vadd.f32 %v1292, %v1293
            %v1295 = vsel %vm1275, %v944, 0.0
            %v1296 = vadd.f32 %v1294, %v1295
            %v1297 = vsel %vm1275, %v956, 0.0
            %v1298 = vadd.f32 %v1296, %v1297
            %v1299 = vsel %vm1275, %v968, 0.0
            %v1300 = vadd.f32 %v1298, %v1299
            %v1301 = vsel %vm1275, %v980, 0.0
            %v1302 = vadd.f32 %v1300, %v1301
            %v1303 = vsel %vm1275, %v992, 0.0
            %v1304 = vadd.f32 %v1302, %v1303
            %v1305 = vsel %vm1275, %v1004, 0.0
            %v1306 = vadd.f32 %v1304, %v1305
            %v1307 = vsel %vm1275, %v1016, 0.0
            %v1308 = vadd.f32 %v1306, %v1307
            %v1309 = vsel %vm1275, %v1028, 0.0
            %v1310 = vadd.f32 %v1308, %v1309
            %v1311 = vsel %vm1275, %v1040, 0.0
            %v1312 = vadd.f32 %v1310, %v1311
            %v1313 = vsel %vm1275, %v1052, 0.0
            %v1314 = vadd.f32 %v1312, %v1313
            %v1315 = vsel %vm1275, %v1064, 0.0
            %v1316 = vadd.f32 %v1314, %v1315
            %v1317 = vsel %vm1275, %v1076, 0.0
            %v1318 = vadd.f32 %v1316, %v1317
            %v1319 = vsel %vm1275, %v1088, 0.0
            %v1320 = vadd.f32 %v1318, %v1319
            %v1321 = vsel %vm1275, %v1100, 0.0
            %v1322 = vadd.f32 %v1320, %v1321
            %v1323 = vsel %vm1275, %v1112, 0.0
            %v1324 = vadd.f32 %v1322, %v1323
            %v1325 = vsel %vm1275, %v1124, 0.0
            %v1326 = vadd.f32 %v1324, %v1325
            %v1327 = vsel %vm1275, %v1136, 0.0
            %v1328 = vadd.f32 %v1326, %v1327
            %v1329 = vsel %vm1275, %v1148, 0.0
            %v1330 = vadd.f32 %v1328, %v1329
            %v1331 = vsel %vm1275, %v1160, 0.0
            %v1332 = vadd.f32 %v1330, %v1331
            %v1333 = vsel %vm1275, %v1172, 0.0
            %v1334 = vadd.f32 %v1332, %v1333
            %v1335 = vsel %vm1275, %v1184, 0.0
            %v1336 = vadd.f32 %v1334, %v1335
            %v1337 = vsel %vm1275, %v1196, 0.0
            %v1338 = vadd.f32 %v1336, %v1337
            %v1339 = vsel %vm1275, %v1208, 0.0
            %v1340 = vadd.f32 %v1338, %v1339
            %v1341 = vsel %vm1275, %v1220, 0.0
            %v1342 = vadd.f32 %v1340, %v1341
            %v1343 = vsel %vm1275, %v1232, 0.0
            %v1344 = vadd.f32 %v1342, %v1343
            %v1345 = vsel %vm1275, %v1244, 0.0
            %v1346 = vadd.f32 %v1344, %v1345
            %v1347 = vsel %vm1275, %v1256, 0.0
            %v1348 = vadd.f32 %v1346, %v1347
            %v1349 = vsel %vm1275, %v1268, 0.0
            %v1350 = vadd.f32 %v1348, %v1349
            %v1351 = vrot.slane %v1350, 4
            %v1352 = vadd.f32 %v1350, %v1351
            %v1353 = vrot.slane %v1352, 2
            %v1354 = vadd.f32 %v1352, %v1353
            %v1355 = vrot.slane %v1354, 1
            %v1356 = vadd.f32 %v1354, %v1355
            %v1357 = vadd.f32 %v1274, %v1356
            %vm1358 = vcmask 122880
            %1359 = vst.msk [vmem:[#allocation2] sm:$0x1] %vm1358, %v1357
          $region44: #{tpu_custom_call.1} parent=39 // pred_fallthru
            _
          %p1360 = scmp.gt.s32.totalorder %s1269, %s205
          // Predicated region
          $region45: #{tpu_custom_call.1} parent=39 // pred_check
            %p1361 = pneg %p1360
          $region46: #{tpu_custom_call.1} parent=39 // pred_check_branch
            %1363 = sbr.rel (%p1361) target = $region48
          $region47: #{tpu_custom_call.1} parent=39 // pred_region
            %v1364 = vlaneseq
            %v1365 = vshrl.u32 %v1364, 7
            %v1366 = vadd.s32 %v1365, 8
            %v1367 = vadd.s32 %v1365, 16
            %v1368 = vadd.s32 %v1365, 24
            %v1369 = vadd.s32 %v1365, 32
            %v1370 = vadd.s32 %v1365, 40
            %v1371 = vadd.s32 %v1365, 48
            %v1372 = vadd.s32 %v1365, 56
            %v1373 = vadd.s32 %v1365, 64
            %v1374 = vadd.s32 %v1365, 72
            %v1375 = vadd.s32 %v1365, 80
            %v1376 = vadd.s32 %v1365, 88
            %v1377 = vadd.s32 %v1365, 96
            %v1378 = vadd.s32 %v1365, 104
            %v1379 = vadd.s32 %v1365, 112
            %v1380 = vadd.s32 %v1365, 120
            %v1381 = vadd.s32 %v1365, 128
            %v1382 = vadd.s32 %v1365, 136
            %v1383 = vadd.s32 %v1365, 144
            %v1384 = vadd.s32 %v1365, 152
            %v1385 = vadd.s32 %v1365, 160
            %v1386 = vadd.s32 %v1365, 168
            %v1387 = vadd.s32 %v1365, 176
            %v1388 = vadd.s32 %v1365, 184
            %v1389 = vadd.s32 %v1365, 192
            %v1390 = vadd.s32 %v1365, 200
            %v1391 = vadd.s32 %v1365, 208
            %v1392 = vadd.s32 %v1365, 216
            %v1393 = vadd.s32 %v1365, 224
            %v1394 = vadd.s32 %v1365, 232
            %v1395 = vadd.s32 %v1365, 240
            %v1396 = vadd.s32 %v1365, 248
            %v1397 = vadd.s32 %v1365, 256
            %v1398 = vadd.s32 %v1365, 264
            %v1399 = vadd.s32 %v1365, 272
            %v1400 = vadd.s32 %v1365, 280
            %v1401 = vadd.s32 %v1365, 288
            %v1402 = vadd.s32 %v1365, 296
            %v1403 = vstv %s206
            %v1404 = vadd.s32 %v1403, %v1365
            %v1405 = vadd.s32 %v1403, %v1366
            %v1406 = vadd.s32 %v1403, %v1367
            %v1407 = vadd.s32 %v1403, %v1368
            %v1408 = vadd.s32 %v1403, %v1369
            %v1409 = vadd.s32 %v1403, %v1370
            %v1410 = vadd.s32 %v1403, %v1371
            %v1411 = vadd.s32 %v1403, %v1372
            %v1412 = vadd.s32 %v1403, %v1373
            %v1413 = vadd.s32 %v1403, %v1374
            %v1414 = vadd.s32 %v1403, %v1375
            %v1415 = vadd.s32 %v1403, %v1376
            %v1416 = vadd.s32 %v1403, %v1377
            %v1417 = vadd.s32 %v1403, %v1378
            %v1418 = vadd.s32 %v1403, %v1379
            %v1419 = vadd.s32 %v1403, %v1380
            %v1420 = vadd.s32 %v1403, %v1381
            %v1421 = vadd.s32 %v1403, %v1382
            %v1422 = vadd.s32 %v1403, %v1383
            %v1423 = vadd.s32 %v1403, %v1384
            %v1424 = vadd.s32 %v1403, %v1385
            %v1425 = vadd.s32 %v1403, %v1386
            %v1426 = vadd.s32 %v1403, %v1387
            %v1427 = vadd.s32 %v1403, %v1388
            %v1428 = vadd.s32 %v1403, %v1389
            %v1429 = vadd.s32 %v1403, %v1390
            %v1430 = vadd.s32 %v1403, %v1391
            %v1431 = vadd.s32 %v1403, %v1392
            %v1432 = vadd.s32 %v1403, %v1393
            %v1433 = vadd.s32 %v1403, %v1394
            %v1434 = vadd.s32 %v1403, %v1395
            %v1435 = vadd.s32 %v1403, %v1396
            %v1436 = vadd.s32 %v1403, %v1397
            %v1437 = vadd.s32 %v1403, %v1398
            %v1438 = vadd.s32 %v1403, %v1399
            %v1439 = vadd.s32 %v1403, %v1400
            %v1440 = vadd.s32 %v1403, %v1401
            %v1441 = vadd.s32 %v1403, %v1402
            %v1442 = vld [vmem:[#allocation2] sm:$0x1]
            %v1443 = vstv %s205
            %vm1444 = vcmp.lt.s32.totalorder %v1404, %v1443
            %vm1445 = vcmp.lt.s32.totalorder %v1405, %v1443
            %vm1446 = vcmp.lt.s32.totalorder %v1406, %v1443
            %vm1447 = vcmp.lt.s32.totalorder %v1407, %v1443
            %vm1448 = vcmp.lt.s32.totalorder %v1408, %v1443
            %vm1449 = vcmp.lt.s32.totalorder %v1409, %v1443
            %vm1450 = vcmp.lt.s32.totalorder %v1410, %v1443
            %vm1451 = vcmp.lt.s32.totalorder %v1411, %v1443
            %vm1452 = vcmp.lt.s32.totalorder %v1412, %v1443
            %vm1453 = vcmp.lt.s32.totalorder %v1413, %v1443
            %vm1454 = vcmp.lt.s32.totalorder %v1414, %v1443
            %vm1455 = vcmp.lt.s32.totalorder %v1415, %v1443
            %vm1456 = vcmp.lt.s32.totalorder %v1416, %v1443
            %vm1457 = vcmp.lt.s32.totalorder %v1417, %v1443
            %vm1458 = vcmp.lt.s32.totalorder %v1418, %v1443
            %vm1459 = vcmp.lt.s32.totalorder %v1419, %v1443
            %vm1460 = vcmp.lt.s32.totalorder %v1420, %v1443
            %vm1461 = vcmp.lt.s32.totalorder %v1421, %v1443
            %vm1462 = vcmp.lt.s32.totalorder %v1422, %v1443
            %vm1463 = vcmp.lt.s32.totalorder %v1423, %v1443
            %vm1464 = vcmp.lt.s32.totalorder %v1424, %v1443
            %vm1465 = vcmp.lt.s32.totalorder %v1425, %v1443
            %vm1466 = vcmp.lt.s32.totalorder %v1426, %v1443
            %vm1467 = vcmp.lt.s32.totalorder %v1427, %v1443
            %vm1468 = vcmp.lt.s32.totalorder %v1428, %v1443
            %vm1469 = vcmp.lt.s32.totalorder %v1429, %v1443
            %vm1470 = vcmp.lt.s32.totalorder %v1430, %v1443
            %vm1471 = vcmp.lt.s32.totalorder %v1431, %v1443
            %vm1472 = vcmp.lt.s32.totalorder %v1432, %v1443
            %vm1473 = vcmp.lt.s32.totalorder %v1433, %v1443
            %vm1474 = vcmp.lt.s32.totalorder %v1434, %v1443
            %vm1475 = vcmp.lt.s32.totalorder %v1435, %v1443
            %vm1476 = vcmp.lt.s32.totalorder %v1436, %v1443
            %vm1477 = vcmp.lt.s32.totalorder %v1437, %v1443
            %vm1478 = vcmp.lt.s32.totalorder %v1438, %v1443
            %vm1479 = vcmp.lt.s32.totalorder %v1439, %v1443
            %vm1480 = vcmp.lt.s32.totalorder %v1440, %v1443
            %vm1481 = vcmp.lt.s32.totalorder %v1441, %v1443
            %v1482 = vsel %vm1444, %v824, 0.0
            %v1483 = vsel %vm1445, %v836, 0.0
            %v1484 = vsel %vm1446, %v848, 0.0
            %v1485 = vsel %vm1447, %v860, 0.0
            %v1486 = vsel %vm1448, %v872, 0.0
            %v1487 = vsel %vm1449, %v884, 0.0
            %v1488 = vsel %vm1450, %v896, 0.0
            %v1489 = vsel %vm1451, %v908, 0.0
            %v1490 = vsel %vm1452, %v920, 0.0
            %v1491 = vsel %vm1453, %v932, 0.0
            %v1492 = vsel %vm1454, %v944, 0.0
            %v1493 = vsel %vm1455, %v956, 0.0
            %v1494 = vsel %vm1456, %v968, 0.0
            %v1495 = vsel %vm1457, %v980, 0.0
            %v1496 = vsel %vm1458, %v992, 0.0
            %v1497 = vsel %vm1459, %v1004, 0.0
            %v1498 = vsel %vm1460, %v1016, 0.0
            %v1499 = vsel %vm1461, %v1028, 0.0
            %v1500 = vsel %vm1462, %v1040, 0.0
            %v1501 = vsel %vm1463, %v1052, 0.0
            %v1502 = vsel %vm1464, %v1064, 0.0
            %v1503 = vsel %vm1465, %v1076, 0.0
            %v1504 = vsel %vm1466, %v1088, 0.0
            %v1505 = vsel %vm1467, %v1100, 0.0
            %v1506 = vsel %vm1468, %v1112, 0.0
            %v1507 = vsel %vm1469, %v1124, 0.0
            %v1508 = vsel %vm1470, %v1136, 0.0
            %v1509 = vsel %vm1471, %v1148, 0.0
            %v1510 = vsel %vm1472, %v1160, 0.0
            %v1511 = vsel %vm1473, %v1172, 0.0
            %v1512 = vsel %vm1474, %v1184, 0.0
            %v1513 = vsel %vm1475, %v1196, 0.0
            %v1514 = vsel %vm1476, %v1208, 0.0
            %v1515 = vsel %vm1477, %v1220, 0.0
            %v1516 = vsel %vm1478, %v1232, 0.0
            %v1517 = vsel %vm1479, %v1244, 0.0
            %v1518 = vsel %vm1480, %v1256, 0.0
            %v1519 = vsel %vm1481, %v1268, 0.0
            %vm1520 = vcmask 130048
            %v1521 = vsel %vm1520, %v1482, 0.0
            %v1522 = vsel %vm1520, %v1483, 0.0
            %v1523 = vadd.f32 %v1521, %v1522
            %v1524 = vsel %vm1520, %v1484, 0.0
            %v1525 = vadd.f32 %v1523, %v1524
            %v1526 = vsel %vm1520, %v1485, 0.0
            %v1527 = vadd.f32 %v1525, %v1526
            %v1528 = vsel %vm1520, %v1486, 0.0
            %v1529 = vadd.f32 %v1527, %v1528
            %v1530 = vsel %vm1520, %v1487, 0.0
            %v1531 = vadd.f32 %v1529, %v1530
            %v1532 = vsel %vm1520, %v1488, 0.0
            %v1533 = vadd.f32 %v1531, %v1532
            %v1534 = vsel %vm1520, %v1489, 0.0
            %v1535 = vadd.f32 %v1533, %v1534
            %v1536 = vsel %vm1520, %v1490, 0.0
            %v1537 = vadd.f32 %v1535, %v1536
            %v1538 = vsel %vm1520, %v1491, 0.0
            %v1539 = vadd.f32 %v1537, %v1538
            %v1540 = vsel %vm1520, %v1492, 0.0
            %v1541 = vadd.f32 %v1539, %v1540
            %v1542 = vsel %vm1520, %v1493, 0.0
            %v1543 = vadd.f32 %v1541, %v1542
            %v1544 = vsel %vm1520, %v1494, 0.0
            %v1545 = vadd.f32 %v1543, %v1544
            %v1546 = vsel %vm1520, %v1495, 0.0
            %v1547 = vadd.f32 %v1545, %v1546
            %v1548 = vsel %vm1520, %v1496, 0.0
            %v1549 = vadd.f32 %v1547, %v1548
            %v1550 = vsel %vm1520, %v1497, 0.0
            %v1551 = vadd.f32 %v1549, %v1550
            %v1552 = vsel %vm1520, %v1498, 0.0
            %v1553 = vadd.f32 %v1551, %v1552
            %v1554 = vsel %vm1520, %v1499, 0.0
            %v1555 = vadd.f32 %v1553, %v1554
            %v1556 = vsel %vm1520, %v1500, 0.0
            %v1557 = vadd.f32 %v1555, %v1556
            %v1558 = vsel %vm1520, %v1501, 0.0
            %v1559 = vadd.f32 %v1557, %v1558
            %v1560 = vsel %vm1520, %v1502, 0.0
            %v1561 = vadd.f32 %v1559, %v1560
            %v1562 = vsel %vm1520, %v1503, 0.0
            %v1563 = vadd.f32 %v1561, %v1562
            %v1564 = vsel %vm1520, %v1504, 0.0
            %v1565 = vadd.f32 %v1563, %v1564
            %v1566 = vsel %vm1520, %v1505, 0.0
            %v1567 = vadd.f32 %v1565, %v1566
            %v1568 = vsel %vm1520, %v1506, 0.0
            %v1569 = vadd.f32 %v1567, %v1568
            %v1570 = vsel %vm1520, %v1507, 0.0
            %v1571 = vadd.f32 %v1569, %v1570
            %v1572 = vsel %vm1520, %v1508, 0.0
            %v1573 = vadd.f32 %v1571, %v1572
            %v1574 = vsel %vm1520, %v1509, 0.0
            %v1575 = vadd.f32 %v1573, %v1574
            %v1576 = vsel %vm1520, %v1510, 0.0
            %v1577 = vadd.f32 %v1575, %v1576
            %v1578 = vsel %vm1520, %v1511, 0.0
            %v1579 = vadd.f32 %v1577, %v1578
            %v1580 = vsel %vm1520, %v1512, 0.0
            %v1581 = vadd.f32 %v1579, %v1580
            %v1582 = vsel %vm1520, %v1513, 0.0
            %v1583 = vadd.f32 %v1581, %v1582
            %v1584 = vsel %vm1520, %v1514, 0.0
            %v1585 = vadd.f32 %v1583, %v1584
            %v1586 = vsel %vm1520, %v1515, 0.0
            %v1587 = vadd.f32 %v1585, %v1586
            %v1588 = vsel %vm1520, %v1516, 0.0
            %v1589 = vadd.f32 %v1587, %v1588
            %v1590 = vsel %vm1520, %v1517, 0.0
            %v1591 = vadd.f32 %v1589, %v1590
            %v1592 = vsel %vm1520, %v1518, 0.0
            %v1593 = vadd.f32 %v1591, %v1592
            %v1594 = vsel %vm1520, %v1519, 0.0
            %v1595 = vadd.f32 %v1593, %v1594
            %v1596 = vrot.slane %v1595, 4
            %v1597 = vadd.f32 %v1595, %v1596
            %v1598 = vrot.slane %v1597, 2
            %v1599 = vadd.f32 %v1597, %v1598
            %v1600 = vrot.slane %v1599, 1
            %v1601 = vadd.f32 %v1599, %v1600
            %v1602 = vadd.f32 %v1442, %v1601
            %vm1603 = vcmask 122880
            %1604 = vst.msk [vmem:[#allocation2] sm:$0x1] %vm1603, %v1602
          $region48: #{tpu_custom_call.1} parent=39 // pred_fallthru
            _
        $region40: #{tpu_custom_call.1} parent=31 // pred_fallthru
          _
        // Predicated region
        $region49: #{tpu_custom_call.1} parent=31 // pred_check
          %p1605 = pneg %p207
        $region50: #{tpu_custom_call.1} parent=31 // pred_check_branch
          %1607 = sbr.rel (%p1605) target = $region52
        $region51: #{tpu_custom_call.1} parent=31 // pred_region
          %v1608 = vld [vmem:[#allocation2] sm:$0x1]
          %vm1609 = vcmask 122880
          %v1610 = vsel %vm1609, %v1608, inf
          %1611 = vmin.xlane.f32.xlu0 %v1610
          %v1612 = vpop.xlane.xlu0 %1611
          %v1613 = vrot.slane %v1612, 4
          %v1614 = vmin.f32 %v1612, %v1613
          %v1615 = vrot.slane %v1614, 2
          %v1616 = vmin.f32 %v1614, %v1615
          %v1617 = vrot.slane %v1616, 1
          %v1618 = vmin.f32 %v1616, %v1617
          %s1619 = vtos %v1618
          %v1620 = vsel %vm1609, %v1608, -inf
          %1621 = vmax.xlane.f32.xlu0 %v1620
          %v1622 = vpop.xlane.xlu0 %1621
          %v1623 = vrot.slane %v1622, 4
          %v1624 = vmax.f32 %v1622, %v1623
          %v1625 = vrot.slane %v1624, 2
          %v1626 = vmax.f32 %v1624, %v1625
          %v1627 = vrot.slane %v1626, 1
          %v1628 = vmax.f32 %v1626, %v1627
          %s1629 = vtos %v1628
          %s1630 = ssub.f32 %s1629, %s1619
          %p1631 = scmp.gt.f32.partialorder %s1630, 0.0
          %s1632 = scalar_select %p1631, %s1630, 1.0
          %v1633 = vstv %s1619
          %v1634 = vsub.f32 %v1608, %v1633
          %v1635 = vstv %s1632
          %v1636 = vrcp.pop %v1635
          %v1637 = vmul.f32 %v1635, %v1636
          %v1638 = vsub.f32 1.0, %v1637
          %v1639 = vmul.f32 %v1636, %v1638
          %v1640 = vadd.f32 %v1636, %v1639
          %vm1641 = vweird.f32 %v1635
          %vm1642 = vweird.f32 %v1636
          %vm1643 = vmor %vm1641, %vm1642
          %v1644 = vsel %vm1643, %v1636, %v1640
          %v1645 = vand.u32 2147483647, %v1635
          %vm1646 = vcmp.eq.f32.partialorder %v1645, 8.507059e+37
          %v1647 = vand.u32 %v1635, 2147483648
          %v1648 = vor.u32 1.1754944e-38, %v1647
          %v1649 = vsel %vm1646, %v1648, %v1644
          %v1650 = vmul.f32 %v1634, %v1649
          %1651 = vst.msk [vmem:[%s194] sm:$0x1] %vm1609, %v1650
        $region52: #{tpu_custom_call.1} parent=31 // pred_fallthru
          _
        %s1652 = sand.u32 %s116, 1
        %s1653 = scalar_lea.sflag [#allocation6], %s1652
        %s1654 = sand.u32 %s116, 1
        %s1655 = scalar_lea.vmem [#allocation5], %s1654
        // Predicated region
        $region53: #{tpu_custom_call.1} parent=31 // pred_check
          %p1656 = pneg %p126
        $region54: #{tpu_custom_call.1} parent=31 // pred_check_branch
          %1658 = sbr.rel (%p1656) target = $region56
        $region55: #{tpu_custom_call.1} parent=31 // pred_region
          %1660 = vsyncadd %s1653, 0
          %s1661 = scalar_lea.hbm %s4, %s30
          %s1663 = sshll.u32 %s1655, 4
          %s1664 = int_to_ptr.vmem [resolvable:$true] %s1663
          %s1665 = sshll.u32 %s1661, 4
          %s1666 = int_to_ptr.hbm [resolvable:$true] %s1665
          %1668 = dma.vmem_to_hbm [thread:$0]  %s1664, 16, %s1666, %s1653
        $region56: #{tpu_custom_call.1} parent=31 // pred_fallthru
          _
      $region32: #{tpu_custom_call.1} parent=5 // pred_fallthru
        _
      %p1669 = scmp.le.s32.totalorder 2, %s21
      // Predicated region
      $region57: #{tpu_custom_call.1} parent=5 // pred_check
        %p1670 = pneg %p1669
      $region58: #{tpu_custom_call.1} parent=5 // pred_check_branch
        %1672 = sbr.rel (%p1670) target = $region60
      $region59: #{tpu_custom_call.1} parent=5 // pred_region
        %s1673 = ssub.s32 %s21, 2
        // Predicated region
        $region61: #{tpu_custom_call.1} parent=59 // pred_check
          %p1674 = pneg %p132
        $region62: #{tpu_custom_call.1} parent=59 // pred_check_branch
          %1676 = sbr.rel (%p1674) target = $region64
        $region63: #{tpu_custom_call.1} parent=59 // pred_region
          %s1677 = sand.u32 %s117, 1
          %s1678 = scalar_lea.sflag [#allocation6], %s1677
          %s1679 = sand.u32 %s117, 1
          %s1680 = scalar_lea.vmem [#allocation5], %s1679
          %1682 = dma.done %s1678, 16
        $region64: #{tpu_custom_call.1} parent=59 // pred_fallthru
          _
      $region60: #{tpu_custom_call.1} parent=5 // pred_fallthru
        _
    $region6: #{tpu_custom_call.1} parent=1 // loop_footer
      %s25 = sadd.s32 1, %s21
    $region7: #{tpu_custom_call.1} parent=1 // loop_footer_branch
      %20 = sbr.rel target = $region3
    $region8: #{tpu_custom_call.1} parent=1 // loop_exit
      _
    %1683 = vsyncpa [#allocation6], 1
    %s1684 = scalar_lea.sflag [#allocation6], 1
    %1685 = vsyncpa %s1684, 1

</llo_original>
